<compile_context>
chip_gen: v5e
topology: v5e:2x2
jax: 0.10.0
libtpu: 0.0.40
codegen_flags: <defaults>
</compile_context>

<pallas_src>
import functools
import math

import jax
import jax.numpy as jnp
from jax import lax
from jax.experimental import pallas as pl
from jax.experimental.pallas import tpu as pltpu


# dot_general dimension_numbers: contract the last dim of both operands
# (x[M, K] . w[N, K] -> [M, N]) so the MXU consumes the "transposed" operand
# directly; no XLU transpose.
_CONTRACT_LAST = (((1,), (1,)), ((), ()))


def _mha_kernel(q_ref, k_ref, v_ref,
                wq_ref, bq_ref, wk_ref, bk_ref, wv_ref, bv_ref,
                wo_ref, bo_ref,
                out_ref, attn_ref,
                *, batch, seq, num_heads, d_k):
    # Whole (toy-sized) problem in a single invocation: q/k/v arrive flattened
    # to [B*S, D] so each projection is one full-depth matmul over all rows.
    xq = q_ref[...]
    xk = k_ref[...]
    xv = v_ref[...]

    # x @ W.T + b (the 1/sqrt(d_k) score scale is pre-folded into wq/bq).
    Q = lax.dot_general(xq, wq_ref[...], _CONTRACT_LAST,
                        preferred_element_type=jnp.float32) + bq_ref[0]
    K = lax.dot_general(xk, wk_ref[...], _CONTRACT_LAST,
                        preferred_element_type=jnp.float32) + bk_ref[0]
    V = lax.dot_general(xv, wv_ref[...], _CONTRACT_LAST,
                        preferred_element_type=jnp.float32) + bv_ref[0]

    wo = wo_ref[...]          # [D, D], read once
    bo = bo_ref[0]            # [D]

    # Static unroll over (batch, head): B*H == 8 here, small enough that the
    # unroll cannot pressure the vreg file.  Per-head contexts never touch
    # VMEM scratch; the output projection is accumulated per head in vregs.
    for b in range(batch):
        r0 = b * seq
        Qb = Q[r0:r0 + seq, :]                      # [S, D]
        Kb = K[r0:r0 + seq, :]
        Vb = V[r0:r0 + seq, :]
        acc = None                                  # [S, D] output-projection acc
        for h in range(num_heads):
            lo = h * d_k
            qh = Qb[:, lo:lo + d_k]                 # [S, d_k]
            kh = Kb[:, lo:lo + d_k]
            vh = Vb[:, lo:lo + d_k]

            # scores = qh @ kh.T (scale already folded into the Q projection).
            scores = lax.dot_general(qh, kh, _CONTRACT_LAST,
                                     preferred_element_type=jnp.float32)

            # Numerically stable softmax; reciprocal goes to the EUP slot
            # (approx=False: close enough to a true divide for 1e-5 tolerance).
            m = jnp.max(scores, axis=-1, keepdims=True)
            e = jnp.exp(scores - m)
            p = e * pl.reciprocal(jnp.sum(e, axis=-1, keepdims=True))   # [S, S]

            # Lane-dense attn slab [B*S, H*S]: head h of batch b owns rows
            # [b*S, (b+1)*S) and lanes [h*S, (h+1)*S); the HBM writeback is a
            # single dense copy of the whole block.
            attn_ref[r0:r0 + seq, h * seq:(h + 1) * seq] = p.astype(attn_ref.dtype)

            # ctx_h = p @ vh, then its contribution to the W_o projection:
            # out += ctx_h @ W_o[:, lo:hi].T   (contract-last, no transpose).
            ctx_h = jnp.dot(p, vh, preferred_element_type=jnp.float32)  # [S, d_k]
            contrib = lax.dot_general(ctx_h, wo[:, lo:lo + d_k], _CONTRACT_LAST,
                                      preferred_element_type=jnp.float32)  # [S, D]
            acc = contrib if acc is None else acc + contrib

        out_ref[r0:r0 + seq, :] = (acc + bo).astype(out_ref.dtype)


def multi_head_attention(q, k, v, params, num_heads):
    """q, k, v: [B, S, D] float32. params: dict of Linear weights/biases."""
    B, S, D = q.shape
    assert D % num_heads == 0, "d_model must be divisible by num_heads"
    d_k = D // num_heads
    scale = 1.0 / math.sqrt(d_k)

    # Fold the 1/sqrt(d_k) score scale into the Q projection (free, host-side).
    wq = (params["wq"] * scale).astype(jnp.float32)
    bq = (params["bq"] * scale).reshape(1, D).astype(jnp.float32)
    wk, bk = params["wk"], params["bk"].reshape(1, D)
    wv, bv = params["wv"], params["bv"].reshape(1, D)
    wo, bo = params["wo"], params["bo"].reshape(1, D)

    # Flatten batch into the row dim so one kernel invocation covers everything.
    qf = q.reshape(B * S, D)
    kf = k.reshape(B * S, D)
    vf = v.reshape(B * S, D)

    kernel = functools.partial(_mha_kernel, batch=B, seq=S,
                               num_heads=num_heads, d_k=d_k)

    out_flat, attn_flat = pl.pallas_call(
        kernel,
        out_shape=(jax.ShapeDtypeStruct((B * S, D), jnp.float32),
                   jax.ShapeDtypeStruct((B * S, num_heads * S), jnp.float32)),
        # No grid: every input/output is a single full-array VMEM block
        # (default specs), so there is no per-step overhead and no double
        # buffering of the grid-invariant weights.
        compiler_params=pltpu.CompilerParams(
            vmem_limit_bytes=32 * 1024 * 1024),   # ample headroom; safe on v5e/v6e/v7x
    )(qf, kf, vf, wq, bq, wk, bk, wv, bv, wo, bo)

    out = out_flat.reshape(B, S, D)
    attn = attn_flat.reshape(B, S, num_heads, S).transpose(0, 2, 1, 3)
    return out, attn


def _reference(q, k, v, params, num_heads):
    """Pure-JAX reference mirroring the PyTorch forward (eval mode)."""
    B, S, D = q.shape
    d_k = D // num_heads

    def lin(x, w, b):
        return x @ w.T + b

    Q = lin(q, params["wq"], params["bq"]).reshape(B, S, num_heads, d_k).transpose(0, 2, 1, 3)
    K = lin(k, params["wk"], params["bk"]).reshape(B, S, num_heads, d_k).transpose(0, 2, 1, 3)
    V = lin(v, params["wv"], params["bv"]).reshape(B, S, num_heads, d_k).transpose(0, 2, 1, 3)

    scores = jnp.einsum("bhqd,bhkd->bhqk", Q, K) / math.sqrt(d_k)
    attn = jax.nn.softmax(scores, axis=-1)
    ctx = jnp.einsum("bhqk,bhkd->bhqd", attn, V)
    ctx = ctx.transpose(0, 2, 1, 3).reshape(B, S, D)
    out = lin(ctx, params["wo"], params["bo"])
    return out, attn


if __name__ == "__main__":
    B, S, D, H = 2, 8, 32, 4

    key = jax.random.PRNGKey(0)
    keys = jax.random.split(key, 12)
    bound = 1.0 / math.sqrt(D)  # mimic PyTorch Linear uniform init scale

    def uni(kk, shape):
        return jax.random.uniform(kk, shape, jnp.float32, -bound, bound)

    params = {
        "wq": uni(keys[0], (D, D)), "bq": uni(keys[1], (D,)),
        "wk": uni(keys[2], (D, D)), "bk": uni(keys[3], (D,)),
        "wv": uni(keys[4], (D, D)), "bv": uni(keys[5], (D,)),
        "wo": uni(keys[6], (D, D)), "bo": uni(keys[7], (D,)),
    }

    q = jax.random.normal(keys[8], (B, S, D), jnp.float32)
    k = jax.random.normal(keys[9], (B, S, D), jnp.float32)
    v = jax.random.normal(keys[10], (B, S, D), jnp.float32)

    out, attn = multi_head_attention(q, k, v, params, H)
    out = jax.block_until_ready(out)
    attn = jax.block_until_ready(attn)

    ref_out, ref_attn = _reference(q, k, v, params, H)
    assert out.shape == (B, S, D)
    assert attn.shape == (B, H, S, S)
    assert jnp.allclose(out, ref_out, atol=1e-5, rtol=1e-5)
    assert jnp.allclose(attn, ref_attn, atol=1e-5, rtol=1e-5)

    print("KERNEL_OK")
</pallas_src>

<mosaic_0001>
module attributes {stable_mosaic.version = 11 : i64} {
  func.func @_mha_kernel(%arg0: memref<16x32xf32, #tpu.memory_space<vmem>>, %arg1: memref<16x32xf32, #tpu.memory_space<vmem>>, %arg2: memref<16x32xf32, #tpu.memory_space<vmem>>, %arg3: memref<32x32xf32, #tpu.memory_space<vmem>>, %arg4: memref<1x32xf32, #tpu.memory_space<vmem>>, %arg5: memref<32x32xf32, #tpu.memory_space<vmem>>, %arg6: memref<1x32xf32, #tpu.memory_space<vmem>>, %arg7: memref<32x32xf32, #tpu.memory_space<vmem>>, %arg8: memref<1x32xf32, #tpu.memory_space<vmem>>, %arg9: memref<32x32xf32, #tpu.memory_space<vmem>>, %arg10: memref<1x32xf32, #tpu.memory_space<vmem>>, %arg11: memref<16x32xf32, #tpu.memory_space<vmem>>, %arg12: memref<16x32xf32, #tpu.memory_space<vmem>>) attributes {dimension_semantics = [], scalar_prefetch = 0 : i64, scratch_operands = 0 : i64, tpu.core_type = #tpu.core_type<tc>} {
    %c0 = arith.constant 0 : index
    %c0_0 = arith.constant 0 : index
    %0 = vector.load %arg0[%c0, %c0_0] : memref<16x32xf32, #tpu.memory_space<vmem>>, vector<16x32xf32>
    %c0_1 = arith.constant 0 : index
    %c0_2 = arith.constant 0 : index
    %1 = vector.load %arg1[%c0_1, %c0_2] : memref<16x32xf32, #tpu.memory_space<vmem>>, vector<16x32xf32>
    %c0_3 = arith.constant 0 : index
    %c0_4 = arith.constant 0 : index
    %2 = vector.load %arg2[%c0_3, %c0_4] : memref<16x32xf32, #tpu.memory_space<vmem>>, vector<16x32xf32>
    %c0_5 = arith.constant 0 : index
    %c0_6 = arith.constant 0 : index
    %3 = vector.load %arg3[%c0_5, %c0_6] : memref<32x32xf32, #tpu.memory_space<vmem>>, vector<32x32xf32>
    %cst = arith.constant dense<0.000000e+00> : vector<16x32xf32>
    %4 = tpu.matmul %0, %3, %cst {dimension_numbers = #tpu.dot_dimension_numbers<[1], [1], [0], [0], [0, 0, 1, 0], [], []>} : vector<16x32xf32>, vector<32x32xf32>, vector<16x32xf32> -> vector<16x32xf32>
    %c0_7 = arith.constant 0 : index
    %c0_8 = arith.constant 0 : index
    %5 = vector.load %arg4[%c0_7, %c0_8] : memref<1x32xf32, #tpu.memory_space<vmem>>, vector<1x32xf32>
    %6 = vector.shape_cast %5 : vector<1x32xf32> to vector<32xf32>
    %7 = vector.shape_cast %6 : vector<32xf32> to vector<1x32xf32>
    %8 = vector.broadcast %7 : vector<1x32xf32> to vector<16x32xf32>
    %9 = arith.addf %4, %8 : vector<16x32xf32>
    %c0_9 = arith.constant 0 : index
    %c0_10 = arith.constant 0 : index
    %10 = vector.load %arg5[%c0_9, %c0_10] : memref<32x32xf32, #tpu.memory_space<vmem>>, vector<32x32xf32>
    %cst_11 = arith.constant dense<0.000000e+00> : vector<16x32xf32>
    %11 = tpu.matmul %1, %10, %cst_11 {dimension_numbers = #tpu.dot_dimension_numbers<[1], [1], [0], [0], [0, 0, 1, 0], [], []>} : vector<16x32xf32>, vector<32x32xf32>, vector<16x32xf32> -> vector<16x32xf32>
    %c0_12 = arith.constant 0 : index
    %c0_13 = arith.constant 0 : index
    %12 = vector.load %arg6[%c0_12, %c0_13] : memref<1x32xf32, #tpu.memory_space<vmem>>, vector<1x32xf32>
    %13 = vector.shape_cast %12 : vector<1x32xf32> to vector<32xf32>
    %14 = vector.shape_cast %13 : vector<32xf32> to vector<1x32xf32>
    %15 = vector.broadcast %14 : vector<1x32xf32> to vector<16x32xf32>
    %16 = arith.addf %11, %15 : vector<16x32xf32>
    %c0_14 = arith.constant 0 : index
    %c0_15 = arith.constant 0 : index
    %17 = vector.load %arg7[%c0_14, %c0_15] : memref<32x32xf32, #tpu.memory_space<vmem>>, vector<32x32xf32>
    %cst_16 = arith.constant dense<0.000000e+00> : vector<16x32xf32>
    %18 = tpu.matmul %2, %17, %cst_16 {dimension_numbers = #tpu.dot_dimension_numbers<[1], [1], [0], [0], [0, 0, 1, 0], [], []>} : vector<16x32xf32>, vector<32x32xf32>, vector<16x32xf32> -> vector<16x32xf32>
    %c0_17 = arith.constant 0 : index
    %c0_18 = arith.constant 0 : index
    %19 = vector.load %arg8[%c0_17, %c0_18] : memref<1x32xf32, #tpu.memory_space<vmem>>, vector<1x32xf32>
    %20 = vector.shape_cast %19 : vector<1x32xf32> to vector<32xf32>
    %21 = vector.shape_cast %20 : vector<32xf32> to vector<1x32xf32>
    %22 = vector.broadcast %21 : vector<1x32xf32> to vector<16x32xf32>
    %23 = arith.addf %18, %22 : vector<16x32xf32>
    %c0_19 = arith.constant 0 : index
    %c0_20 = arith.constant 0 : index
    %24 = vector.load %arg9[%c0_19, %c0_20] : memref<32x32xf32, #tpu.memory_space<vmem>>, vector<32x32xf32>
    %c0_21 = arith.constant 0 : index
    %c0_22 = arith.constant 0 : index
    %25 = vector.load %arg10[%c0_21, %c0_22] : memref<1x32xf32, #tpu.memory_space<vmem>>, vector<1x32xf32>
    %26 = vector.shape_cast %25 : vector<1x32xf32> to vector<32xf32>
    %27 = vector.extract_strided_slice %9 {offsets = [0, 0], sizes = [8, 32], strides = [1, 1]} : vector<16x32xf32> to vector<8x32xf32>
    %28 = vector.extract_strided_slice %16 {offsets = [0, 0], sizes = [8, 32], strides = [1, 1]} : vector<16x32xf32> to vector<8x32xf32>
    %29 = vector.extract_strided_slice %23 {offsets = [0, 0], sizes = [8, 32], strides = [1, 1]} : vector<16x32xf32> to vector<8x32xf32>
    %30 = vector.extract_strided_slice %27 {offsets = [0, 0], sizes = [8, 8], strides = [1, 1]} : vector<8x32xf32> to vector<8x8xf32>
    %31 = vector.extract_strided_slice %28 {offsets = [0, 0], sizes = [8, 8], strides = [1, 1]} : vector<8x32xf32> to vector<8x8xf32>
    %32 = vector.extract_strided_slice %29 {offsets = [0, 0], sizes = [8, 8], strides = [1, 1]} : vector<8x32xf32> to vector<8x8xf32>
    %cst_23 = arith.constant dense<0.000000e+00> : vector<8x8xf32>
    %33 = tpu.matmul %30, %31, %cst_23 {dimension_numbers = #tpu.dot_dimension_numbers<[1], [1], [0], [0], [0, 0, 1, 0], [], []>} : vector<8x8xf32>, vector<8x8xf32>, vector<8x8xf32> -> vector<8x8xf32>
    %cst_24 = arith.constant dense<0xFF800000> : vector<8xf32>
    %34 = vector.multi_reduction <maximumf>, %33, %cst_24 [1] : vector<8x8xf32> to vector<8xf32>
    %35 = vector.shape_cast %34 : vector<8xf32> to vector<8x1xf32>
    %36 = vector.broadcast %35 : vector<8x1xf32> to vector<8x8xf32>
    %37 = arith.subf %33, %36 : vector<8x8xf32>
    %38 = math.exp %37 : vector<8x8xf32>
    %cst_25 = arith.constant dense<0.000000e+00> : vector<8xf32>
    %39 = vector.multi_reduction <add>, %38, %cst_25 [1] : vector<8x8xf32> to vector<8xf32>
    %40 = vector.shape_cast %39 : vector<8xf32> to vector<8x1xf32>
    %41 = tpu.reciprocal %40 : vector<8x1xf32> -> vector<8x1xf32>
    %42 = vector.broadcast %41 : vector<8x1xf32> to vector<8x8xf32>
    %43 = arith.mulf %38, %42 : vector<8x8xf32>
    %c0_26 = arith.constant 0 : index
    %c0_27 = arith.constant 0 : index
    %44 = vector.load %arg12[%c0_26, %c0_27] : memref<16x32xf32, #tpu.memory_space<vmem>>, vector<8x8xf32>
    tpu.vector_store %arg12[%c0_26, %c0_27], %43 {strides = array<i32>} : memref<16x32xf32, #tpu.memory_space<vmem>>, vector<8x8xf32>,
    %cst_28 = arith.constant dense<0.000000e+00> : vector<8x8xf32>
    %45 = tpu.matmul %43, %32, %cst_28 {dimension_numbers = #tpu.dot_dimension_numbers<[1], [0], [0], [1], [0, 0, 1, 1], [], []>} : vector<8x8xf32>, vector<8x8xf32>, vector<8x8xf32> -> vector<8x8xf32>
    %46 = vector.extract_strided_slice %24 {offsets = [0, 0], sizes = [32, 8], strides = [1, 1]} : vector<32x32xf32> to vector<32x8xf32>
    %cst_29 = arith.constant dense<0.000000e+00> : vector<8x32xf32>
    %47 = tpu.matmul %45, %46, %cst_29 {dimension_numbers = #tpu.dot_dimension_numbers<[1], [1], [0], [0], [0, 0, 1, 0], [], []>} : vector<8x8xf32>, vector<32x8xf32>, vector<8x32xf32> -> vector<8x32xf32>
    %48 = vector.extract_strided_slice %27 {offsets = [0, 8], sizes = [8, 8], strides = [1, 1]} : vector<8x32xf32> to vector<8x8xf32>
    %49 = vector.extract_strided_slice %28 {offsets = [0, 8], sizes = [8, 8], strides = [1, 1]} : vector<8x32xf32> to vector<8x8xf32>
    %50 = vector.extract_strided_slice %29 {offsets = [0, 8], sizes = [8, 8], strides = [1, 1]} : vector<8x32xf32> to vector<8x8xf32>
    %cst_30 = arith.constant dense<0.000000e+00> : vector<8x8xf32>
    %51 = tpu.matmul %48, %49, %cst_30 {dimension_numbers = #tpu.dot_dimension_numbers<[1], [1], [0], [0], [0, 0, 1, 0], [], []>} : vector<8x8xf32>, vector<8x8xf32>, vector<8x8xf32> -> vector<8x8xf32>
    %cst_31 = arith.constant dense<0xFF800000> : vector<8xf32>
    %52 = vector.multi_reduction <maximumf>, %51, %cst_31 [1] : vector<8x8xf32> to vector<8xf32>
    %53 = vector.shape_cast %52 : vector<8xf32> to vector<8x1xf32>
    %54 = vector.broadcast %53 : vector<8x1xf32> to vector<8x8xf32>
    %55 = arith.subf %51, %54 : vector<8x8xf32>
    %56 = math.exp %55 : vector<8x8xf32>
    %cst_32 = arith.constant dense<0.000000e+00> : vector<8xf32>
    %57 = vector.multi_reduction <add>, %56, %cst_32 [1] : vector<8x8xf32> to vector<8xf32>
    %58 = vector.shape_cast %57 : vector<8xf32> to vector<8x1xf32>
    %59 = tpu.reciprocal %58 : vector<8x1xf32> -> vector<8x1xf32>
    %60 = vector.broadcast %59 : vector<8x1xf32> to vector<8x8xf32>
    %61 = arith.mulf %56, %60 : vector<8x8xf32>
    %c0_33 = arith.constant 0 : index
    %c8 = arith.constant 8 : index
    %62 = vector.load %arg12[%c0_33, %c8] : memref<16x32xf32, #tpu.memory_space<vmem>>, vector<8x8xf32>
    tpu.vector_store %arg12[%c0_33, %c8], %61 {strides = array<i32>} : memref<16x32xf32, #tpu.memory_space<vmem>>, vector<8x8xf32>,
    %cst_34 = arith.constant dense<0.000000e+00> : vector<8x8xf32>
    %63 = tpu.matmul %61, %50, %cst_34 {dimension_numbers = #tpu.dot_dimension_numbers<[1], [0], [0], [1], [0, 0, 1, 1], [], []>} : vector<8x8xf32>, vector<8x8xf32>, vector<8x8xf32> -> vector<8x8xf32>
    %64 = vector.extract_strided_slice %24 {offsets = [0, 8], sizes = [32, 8], strides = [1, 1]} : vector<32x32xf32> to vector<32x8xf32>
    %cst_35 = arith.constant dense<0.000000e+00> : vector<8x32xf32>
    %65 = tpu.matmul %63, %64, %cst_35 {dimension_numbers = #tpu.dot_dimension_numbers<[1], [1], [0], [0], [0, 0, 1, 0], [], []>} : vector<8x8xf32>, vector<32x8xf32>, vector<8x32xf32> -> vector<8x32xf32>
    %66 = arith.addf %47, %65 : vector<8x32xf32>
    %67 = vector.extract_strided_slice %27 {offsets = [0, 16], sizes = [8, 8], strides = [1, 1]} : vector<8x32xf32> to vector<8x8xf32>
    %68 = vector.extract_strided_slice %28 {offsets = [0, 16], sizes = [8, 8], strides = [1, 1]} : vector<8x32xf32> to vector<8x8xf32>
    %69 = vector.extract_strided_slice %29 {offsets = [0, 16], sizes = [8, 8], strides = [1, 1]} : vector<8x32xf32> to vector<8x8xf32>
    %cst_36 = arith.constant dense<0.000000e+00> : vector<8x8xf32>
    %70 = tpu.matmul %67, %68, %cst_36 {dimension_numbers = #tpu.dot_dimension_numbers<[1], [1], [0], [0], [0, 0, 1, 0], [], []>} : vector<8x8xf32>, vector<8x8xf32>, vector<8x8xf32> -> vector<8x8xf32>
    %cst_37 = arith.constant dense<0xFF800000> : vector<8xf32>
    %71 = vector.multi_reduction <maximumf>, %70, %cst_37 [1] : vector<8x8xf32> to vector<8xf32>
    %72 = vector.shape_cast %71 : vector<8xf32> to vector<8x1xf32>
    %73 = vector.broadcast %72 : vector<8x1xf32> to vector<8x8xf32>
    %74 = arith.subf %70, %73 : vector<8x8xf32>
    %75 = math.exp %74 : vector<8x8xf32>
    %cst_38 = arith.constant dense<0.000000e+00> : vector<8xf32>
    %76 = vector.multi_reduction <add>, %75, %cst_38 [1] : vector<8x8xf32> to vector<8xf32>
    %77 = vector.shape_cast %76 : vector<8xf32> to vector<8x1xf32>
    %78 = tpu.reciprocal %77 : vector<8x1xf32> -> vector<8x1xf32>
    %79 = vector.broadcast %78 : vector<8x1xf32> to vector<8x8xf32>
    %80 = arith.mulf %75, %79 : vector<8x8xf32>
    %c0_39 = arith.constant 0 : index
    %c16 = arith.constant 16 : index
    %81 = vector.load %arg12[%c0_39, %c16] : memref<16x32xf32, #tpu.memory_space<vmem>>, vector<8x8xf32>
    tpu.vector_store %arg12[%c0_39, %c16], %80 {strides = array<i32>} : memref<16x32xf32, #tpu.memory_space<vmem>>, vector<8x8xf32>,
    %cst_40 = arith.constant dense<0.000000e+00> : vector<8x8xf32>
    %82 = tpu.matmul %80, %69, %cst_40 {dimension_numbers = #tpu.dot_dimension_numbers<[1], [0], [0], [1], [0, 0, 1, 1], [], []>} : vector<8x8xf32>, vector<8x8xf32>, vector<8x8xf32> -> vector<8x8xf32>
    %83 = vector.extract_strided_slice %24 {offsets = [0, 16], sizes = [32, 8], strides = [1, 1]} : vector<32x32xf32> to vector<32x8xf32>
    %cst_41 = arith.constant dense<0.000000e+00> : vector<8x32xf32>
    %84 = tpu.matmul %82, %83, %cst_41 {dimension_numbers = #tpu.dot_dimension_numbers<[1], [1], [0], [0], [0, 0, 1, 0], [], []>} : vector<8x8xf32>, vector<32x8xf32>, vector<8x32xf32> -> vector<8x32xf32>
    %85 = arith.addf %66, %84 : vector<8x32xf32>
    %86 = vector.extract_strided_slice %27 {offsets = [0, 24], sizes = [8, 8], strides = [1, 1]} : vector<8x32xf32> to vector<8x8xf32>
    %87 = vector.extract_strided_slice %28 {offsets = [0, 24], sizes = [8, 8], strides = [1, 1]} : vector<8x32xf32> to vector<8x8xf32>
    %88 = vector.extract_strided_slice %29 {offsets = [0, 24], sizes = [8, 8], strides = [1, 1]} : vector<8x32xf32> to vector<8x8xf32>
    %cst_42 = arith.constant dense<0.000000e+00> : vector<8x8xf32>
    %89 = tpu.matmul %86, %87, %cst_42 {dimension_numbers = #tpu.dot_dimension_numbers<[1], [1], [0], [0], [0, 0, 1, 0], [], []>} : vector<8x8xf32>, vector<8x8xf32>, vector<8x8xf32> -> vector<8x8xf32>
    %cst_43 = arith.constant dense<0xFF800000> : vector<8xf32>
    %90 = vector.multi_reduction <maximumf>, %89, %cst_43 [1] : vector<8x8xf32> to vector<8xf32>
    %91 = vector.shape_cast %90 : vector<8xf32> to vector<8x1xf32>
    %92 = vector.broadcast %91 : vector<8x1xf32> to vector<8x8xf32>
    %93 = arith.subf %89, %92 : vector<8x8xf32>
    %94 = math.exp %93 : vector<8x8xf32>
    %cst_44 = arith.constant dense<0.000000e+00> : vector<8xf32>
    %95 = vector.multi_reduction <add>, %94, %cst_44 [1] : vector<8x8xf32> to vector<8xf32>
    %96 = vector.shape_cast %95 : vector<8xf32> to vector<8x1xf32>
    %97 = tpu.reciprocal %96 : vector<8x1xf32> -> vector<8x1xf32>
    %98 = vector.broadcast %97 : vector<8x1xf32> to vector<8x8xf32>
    %99 = arith.mulf %94, %98 : vector<8x8xf32>
    %c0_45 = arith.constant 0 : index
    %c24 = arith.constant 24 : index
    %100 = vector.load %arg12[%c0_45, %c24] : memref<16x32xf32, #tpu.memory_space<vmem>>, vector<8x8xf32>
    tpu.vector_store %arg12[%c0_45, %c24], %99 {strides = array<i32>} : memref<16x32xf32, #tpu.memory_space<vmem>>, vector<8x8xf32>,
    %cst_46 = arith.constant dense<0.000000e+00> : vector<8x8xf32>
    %101 = tpu.matmul %99, %88, %cst_46 {dimension_numbers = #tpu.dot_dimension_numbers<[1], [0], [0], [1], [0, 0, 1, 1], [], []>} : vector<8x8xf32>, vector<8x8xf32>, vector<8x8xf32> -> vector<8x8xf32>
    %102 = vector.extract_strided_slice %24 {offsets = [0, 24], sizes = [32, 8], strides = [1, 1]} : vector<32x32xf32> to vector<32x8xf32>
    %cst_47 = arith.constant dense<0.000000e+00> : vector<8x32xf32>
    %103 = tpu.matmul %101, %102, %cst_47 {dimension_numbers = #tpu.dot_dimension_numbers<[1], [1], [0], [0], [0, 0, 1, 0], [], []>} : vector<8x8xf32>, vector<32x8xf32>, vector<8x32xf32> -> vector<8x32xf32>
    %104 = arith.addf %85, %103 : vector<8x32xf32>
    %105 = vector.shape_cast %26 : vector<32xf32> to vector<1x32xf32>
    %106 = vector.broadcast %105 : vector<1x32xf32> to vector<8x32xf32>
    %107 = arith.addf %104, %106 : vector<8x32xf32>
    %c0_48 = arith.constant 0 : index
    %c0_49 = arith.constant 0 : index
    %108 = vector.load %arg11[%c0_48, %c0_49] : memref<16x32xf32, #tpu.memory_space<vmem>>, vector<8x32xf32>
    tpu.vector_store %arg11[%c0_48, %c0_49], %107 {strides = array<i32>} : memref<16x32xf32, #tpu.memory_space<vmem>>, vector<8x32xf32>,
    %109 = vector.extract_strided_slice %9 {offsets = [8, 0], sizes = [8, 32], strides = [1, 1]} : vector<16x32xf32> to vector<8x32xf32>
    %110 = vector.extract_strided_slice %16 {offsets = [8, 0], sizes = [8, 32], strides = [1, 1]} : vector<16x32xf32> to vector<8x32xf32>
    %111 = vector.extract_strided_slice %23 {offsets = [8, 0], sizes = [8, 32], strides = [1, 1]} : vector<16x32xf32> to vector<8x32xf32>
    %112 = vector.extract_strided_slice %109 {offsets = [0, 0], sizes = [8, 8], strides = [1, 1]} : vector<8x32xf32> to vector<8x8xf32>
    %113 = vector.extract_strided_slice %110 {offsets = [0, 0], sizes = [8, 8], strides = [1, 1]} : vector<8x32xf32> to vector<8x8xf32>
    %114 = vector.extract_strided_slice %111 {offsets = [0, 0], sizes = [8, 8], strides = [1, 1]} : vector<8x32xf32> to vector<8x8xf32>
    %cst_50 = arith.constant dense<0.000000e+00> : vector<8x8xf32>
    %115 = tpu.matmul %112, %113, %cst_50 {dimension_numbers = #tpu.dot_dimension_numbers<[1], [1], [0], [0], [0, 0, 1, 0], [], []>} : vector<8x8xf32>, vector<8x8xf32>, vector<8x8xf32> -> vector<8x8xf32>
    %cst_51 = arith.constant dense<0xFF800000> : vector<8xf32>
    %116 = vector.multi_reduction <maximumf>, %115, %cst_51 [1] : vector<8x8xf32> to vector<8xf32>
    %117 = vector.shape_cast %116 : vector<8xf32> to vector<8x1xf32>
    %118 = vector.broadcast %117 : vector<8x1xf32> to vector<8x8xf32>
    %119 = arith.subf %115, %118 : vector<8x8xf32>
    %120 = math.exp %119 : vector<8x8xf32>
    %cst_52 = arith.constant dense<0.000000e+00> : vector<8xf32>
    %121 = vector.multi_reduction <add>, %120, %cst_52 [1] : vector<8x8xf32> to vector<8xf32>
    %122 = vector.shape_cast %121 : vector<8xf32> to vector<8x1xf32>
    %123 = tpu.reciprocal %122 : vector<8x1xf32> -> vector<8x1xf32>
    %124 = vector.broadcast %123 : vector<8x1xf32> to vector<8x8xf32>
    %125 = arith.mulf %120, %124 : vector<8x8xf32>
    %c8_53 = arith.constant 8 : index
    %c0_54 = arith.constant 0 : index
    %126 = vector.load %arg12[%c8_53, %c0_54] : memref<16x32xf32, #tpu.memory_space<vmem>>, vector<8x8xf32>
    tpu.vector_store %arg12[%c8_53, %c0_54], %125 {strides = array<i32>} : memref<16x32xf32, #tpu.memory_space<vmem>>, vector<8x8xf32>,
    %cst_55 = arith.constant dense<0.000000e+00> : vector<8x8xf32>
    %127 = tpu.matmul %125, %114, %cst_55 {dimension_numbers = #tpu.dot_dimension_numbers<[1], [0], [0], [1], [0, 0, 1, 1], [], []>} : vector<8x8xf32>, vector<8x8xf32>, vector<8x8xf32> -> vector<8x8xf32>
    %128 = vector.extract_strided_slice %24 {offsets = [0, 0], sizes = [32, 8], strides = [1, 1]} : vector<32x32xf32> to vector<32x8xf32>
    %cst_56 = arith.constant dense<0.000000e+00> : vector<8x32xf32>
    %129 = tpu.matmul %127, %128, %cst_56 {dimension_numbers = #tpu.dot_dimension_numbers<[1], [1], [0], [0], [0, 0, 1, 0], [], []>} : vector<8x8xf32>, vector<32x8xf32>, vector<8x32xf32> -> vector<8x32xf32>
    %130 = vector.extract_strided_slice %109 {offsets = [0, 8], sizes = [8, 8], strides = [1, 1]} : vector<8x32xf32> to vector<8x8xf32>
    %131 = vector.extract_strided_slice %110 {offsets = [0, 8], sizes = [8, 8], strides = [1, 1]} : vector<8x32xf32> to vector<8x8xf32>
    %132 = vector.extract_strided_slice %111 {offsets = [0, 8], sizes = [8, 8], strides = [1, 1]} : vector<8x32xf32> to vector<8x8xf32>
    %cst_57 = arith.constant dense<0.000000e+00> : vector<8x8xf32>
    %133 = tpu.matmul %130, %131, %cst_57 {dimension_numbers = #tpu.dot_dimension_numbers<[1], [1], [0], [0], [0, 0, 1, 0], [], []>} : vector<8x8xf32>, vector<8x8xf32>, vector<8x8xf32> -> vector<8x8xf32>
    %cst_58 = arith.constant dense<0xFF800000> : vector<8xf32>
    %134 = vector.multi_reduction <maximumf>, %133, %cst_58 [1] : vector<8x8xf32> to vector<8xf32>
    %135 = vector.shape_cast %134 : vector<8xf32> to vector<8x1xf32>
    %136 = vector.broadcast %135 : vector<8x1xf32> to vector<8x8xf32>
    %137 = arith.subf %133, %136 : vector<8x8xf32>
    %138 = math.exp %137 : vector<8x8xf32>
    %cst_59 = arith.constant dense<0.000000e+00> : vector<8xf32>
    %139 = vector.multi_reduction <add>, %138, %cst_59 [1] : vector<8x8xf32> to vector<8xf32>
    %140 = vector.shape_cast %139 : vector<8xf32> to vector<8x1xf32>
    %141 = tpu.reciprocal %140 : vector<8x1xf32> -> vector<8x1xf32>
    %142 = vector.broadcast %141 : vector<8x1xf32> to vector<8x8xf32>
    %143 = arith.mulf %138, %142 : vector<8x8xf32>
    %c8_60 = arith.constant 8 : index
    %c8_61 = arith.constant 8 : index
    %144 = vector.load %arg12[%c8_60, %c8_61] : memref<16x32xf32, #tpu.memory_space<vmem>>, vector<8x8xf32>
    tpu.vector_store %arg12[%c8_60, %c8_61], %143 {strides = array<i32>} : memref<16x32xf32, #tpu.memory_space<vmem>>, vector<8x8xf32>,
    %cst_62 = arith.constant dense<0.000000e+00> : vector<8x8xf32>
    %145 = tpu.matmul %143, %132, %cst_62 {dimension_numbers = #tpu.dot_dimension_numbers<[1], [0], [0], [1], [0, 0, 1, 1], [], []>} : vector<8x8xf32>, vector<8x8xf32>, vector<8x8xf32> -> vector<8x8xf32>
    %146 = vector.extract_strided_slice %24 {offsets = [0, 8], sizes = [32, 8], strides = [1, 1]} : vector<32x32xf32> to vector<32x8xf32>
    %cst_63 = arith.constant dense<0.000000e+00> : vector<8x32xf32>
    %147 = tpu.matmul %145, %146, %cst_63 {dimension_numbers = #tpu.dot_dimension_numbers<[1], [1], [0], [0], [0, 0, 1, 0], [], []>} : vector<8x8xf32>, vector<32x8xf32>, vector<8x32xf32> -> vector<8x32xf32>
    %148 = arith.addf %129, %147 : vector<8x32xf32>
    %149 = vector.extract_strided_slice %109 {offsets = [0, 16], sizes = [8, 8], strides = [1, 1]} : vector<8x32xf32> to vector<8x8xf32>
    %150 = vector.extract_strided_slice %110 {offsets = [0, 16], sizes = [8, 8], strides = [1, 1]} : vector<8x32xf32> to vector<8x8xf32>
    %151 = vector.extract_strided_slice %111 {offsets = [0, 16], sizes = [8, 8], strides = [1, 1]} : vector<8x32xf32> to vector<8x8xf32>
    %cst_64 = arith.constant dense<0.000000e+00> : vector<8x8xf32>
    %152 = tpu.matmul %149, %150, %cst_64 {dimension_numbers = #tpu.dot_dimension_numbers<[1], [1], [0], [0], [0, 0, 1, 0], [], []>} : vector<8x8xf32>, vector<8x8xf32>, vector<8x8xf32> -> vector<8x8xf32>
    %cst_65 = arith.constant dense<0xFF800000> : vector<8xf32>
    %153 = vector.multi_reduction <maximumf>, %152, %cst_65 [1] : vector<8x8xf32> to vector<8xf32>
    %154 = vector.shape_cast %153 : vector<8xf32> to vector<8x1xf32>
    %155 = vector.broadcast %154 : vector<8x1xf32> to vector<8x8xf32>
    %156 = arith.subf %152, %155 : vector<8x8xf32>
    %157 = math.exp %156 : vector<8x8xf32>
    %cst_66 = arith.constant dense<0.000000e+00> : vector<8xf32>
    %158 = vector.multi_reduction <add>, %157, %cst_66 [1] : vector<8x8xf32> to vector<8xf32>
    %159 = vector.shape_cast %158 : vector<8xf32> to vector<8x1xf32>
    %160 = tpu.reciprocal %159 : vector<8x1xf32> -> vector<8x1xf32>
    %161 = vector.broadcast %160 : vector<8x1xf32> to vector<8x8xf32>
    %162 = arith.mulf %157, %161 : vector<8x8xf32>
    %c8_67 = arith.constant 8 : index
    %c16_68 = arith.constant 16 : index
    %163 = vector.load %arg12[%c8_67, %c16_68] : memref<16x32xf32, #tpu.memory_space<vmem>>, vector<8x8xf32>
    tpu.vector_store %arg12[%c8_67, %c16_68], %162 {strides = array<i32>} : memref<16x32xf32, #tpu.memory_space<vmem>>, vector<8x8xf32>,
    %cst_69 = arith.constant dense<0.000000e+00> : vector<8x8xf32>
    %164 = tpu.matmul %162, %151, %cst_69 {dimension_numbers = #tpu.dot_dimension_numbers<[1], [0], [0], [1], [0, 0, 1, 1], [], []>} : vector<8x8xf32>, vector<8x8xf32>, vector<8x8xf32> -> vector<8x8xf32>
    %165 = vector.extract_strided_slice %24 {offsets = [0, 16], sizes = [32, 8], strides = [1, 1]} : vector<32x32xf32> to vector<32x8xf32>
    %cst_70 = arith.constant dense<0.000000e+00> : vector<8x32xf32>
    %166 = tpu.matmul %164, %165, %cst_70 {dimension_numbers = #tpu.dot_dimension_numbers<[1], [1], [0], [0], [0, 0, 1, 0], [], []>} : vector<8x8xf32>, vector<32x8xf32>, vector<8x32xf32> -> vector<8x32xf32>
    %167 = arith.addf %148, %166 : vector<8x32xf32>
    %168 = vector.extract_strided_slice %109 {offsets = [0, 24], sizes = [8, 8], strides = [1, 1]} : vector<8x32xf32> to vector<8x8xf32>
    %169 = vector.extract_strided_slice %110 {offsets = [0, 24], sizes = [8, 8], strides = [1, 1]} : vector<8x32xf32> to vector<8x8xf32>
    %170 = vector.extract_strided_slice %111 {offsets = [0, 24], sizes = [8, 8], strides = [1, 1]} : vector<8x32xf32> to vector<8x8xf32>
    %cst_71 = arith.constant dense<0.000000e+00> : vector<8x8xf32>
    %171 = tpu.matmul %168, %169, %cst_71 {dimension_numbers = #tpu.dot_dimension_numbers<[1], [1], [0], [0], [0, 0, 1, 0], [], []>} : vector<8x8xf32>, vector<8x8xf32>, vector<8x8xf32> -> vector<8x8xf32>
    %cst_72 = arith.constant dense<0xFF800000> : vector<8xf32>
    %172 = vector.multi_reduction <maximumf>, %171, %cst_72 [1] : vector<8x8xf32> to vector<8xf32>
    %173 = vector.shape_cast %172 : vector<8xf32> to vector<8x1xf32>
    %174 = vector.broadcast %173 : vector<8x1xf32> to vector<8x8xf32>
    %175 = arith.subf %171, %174 : vector<8x8xf32>
    %176 = math.exp %175 : vector<8x8xf32>
    %cst_73 = arith.constant dense<0.000000e+00> : vector<8xf32>
    %177 = vector.multi_reduction <add>, %176, %cst_73 [1] : vector<8x8xf32> to vector<8xf32>
    %178 = vector.shape_cast %177 : vector<8xf32> to vector<8x1xf32>
    %179 = tpu.reciprocal %178 : vector<8x1xf32> -> vector<8x1xf32>
    %180 = vector.broadcast %179 : vector<8x1xf32> to vector<8x8xf32>
    %181 = arith.mulf %176, %180 : vector<8x8xf32>
    %c8_74 = arith.constant 8 : index
    %c24_75 = arith.constant 24 : index
    %182 = vector.load %arg12[%c8_74, %c24_75] : memref<16x32xf32, #tpu.memory_space<vmem>>, vector<8x8xf32>
    tpu.vector_store %arg12[%c8_74, %c24_75], %181 {strides = array<i32>} : memref<16x32xf32, #tpu.memory_space<vmem>>, vector<8x8xf32>,
    %cst_76 = arith.constant dense<0.000000e+00> : vector<8x8xf32>
    %183 = tpu.matmul %181, %170, %cst_76 {dimension_numbers = #tpu.dot_dimension_numbers<[1], [0], [0], [1], [0, 0, 1, 1], [], []>} : vector<8x8xf32>, vector<8x8xf32>, vector<8x8xf32> -> vector<8x8xf32>
    %184 = vector.extract_strided_slice %24 {offsets = [0, 24], sizes = [32, 8], strides = [1, 1]} : vector<32x32xf32> to vector<32x8xf32>
    %cst_77 = arith.constant dense<0.000000e+00> : vector<8x32xf32>
    %185 = tpu.matmul %183, %184, %cst_77 {dimension_numbers = #tpu.dot_dimension_numbers<[1], [1], [0], [0], [0, 0, 1, 0], [], []>} : vector<8x8xf32>, vector<32x8xf32>, vector<8x32xf32> -> vector<8x32xf32>
    %186 = arith.addf %167, %185 : vector<8x32xf32>
    %187 = vector.shape_cast %26 : vector<32xf32> to vector<1x32xf32>
    %188 = vector.broadcast %187 : vector<1x32xf32> to vector<8x32xf32>
    %189 = arith.addf %186, %188 : vector<8x32xf32>
    %c8_78 = arith.constant 8 : index
    %c0_79 = arith.constant 0 : index
    %190 = vector.load %arg11[%c8_78, %c0_79] : memref<16x32xf32, #tpu.memory_space<vmem>>, vector<8x32xf32>
    tpu.vector_store %arg11[%c8_78, %c0_79], %189 {strides = array<i32>} : memref<16x32xf32, #tpu.memory_space<vmem>>, vector<8x32xf32>,
    return
  }
}

</mosaic_0001>

<llo_original>
// kernel: tpu_custom_call.1
$region0: #{tpu_custom_call.1}
  #allocation0 [shape = 'u32[]', space=smem, size = 0x4, offset = 0x4, fixed_abs, tag = 'smem constant byte address 0x4 - core index']
  #allocation1 [shape = 'u32[72,128]{1,0:T(1,128)}', space=vmem, size = 0x9000, scoped, tag = 'internal scratch']
  %s0 = inlined_call_operand.hbm [shape: f32[16,32], index: 0, kind: input, shape index: {}]
  %s1 = inlined_call_operand.hbm [shape: f32[16,32], index: 1, kind: input, shape index: {}]
  %s2 = inlined_call_operand.hbm [shape: f32[16,32], index: 2, kind: input, shape index: {}]
  %s3 = inlined_call_operand.hbm [shape: f32[32,32], index: 3, kind: input, shape index: {}]
  %s4 = inlined_call_operand.vmem [shape: f32[1,32], index: 4, kind: input, shape index: {}]
  %s5 = inlined_call_operand.hbm [shape: f32[32,32], index: 5, kind: input, shape index: {}]
  %s6 = inlined_call_operand.vmem [shape: f32[1,32], index: 6, kind: input, shape index: {}]
  %s7 = inlined_call_operand.hbm [shape: f32[32,32], index: 7, kind: input, shape index: {}]
  %s8 = inlined_call_operand.vmem [shape: f32[1,32], index: 8, kind: input, shape index: {}]
  %s9 = inlined_call_operand.hbm [shape: f32[32,32], index: 9, kind: input, shape index: {}]
  %s10 = inlined_call_operand.vmem [shape: f32[1,32], index: 10, kind: input, shape index: {}]
  %s11 = inlined_call_operand.hbm [shape: f32[16,32], index: 11, kind: output, shape index: {0}]
  %s12 = inlined_call_operand.hbm [shape: f32[16,32], index: 12, kind: output, shape index: {1}]
  %13 = xla_tuple %s11, %s12
  %s14 = sld [smem:[#allocation0]]
  $region90: #{tpu_custom_call.1} parent=0
    _
  %s16 = ssub.s32 1, %s14
  %s17 = scalar_select 0, %s16, %s14
  $region1: #{tpu_custom_call.1} parent=0
    #allocation2 [shape = 'u8[8192]{0}', space=vmem, size = 0x2000, scoped, tag = 'input window, operand 0, single buffered']
    #allocation3 [shape = 's32[1]{0}', space=sflag, size = 0x4, scoped, tag = 'scoped memory for tpu_custom_call.1']
    #allocation4 [shape = 's32[1]{0}', space=sflag, size = 0x4, scoped, tag = 'scoped memory for tpu_custom_call.1']
    #allocation5 [shape = 'u8[8192]{0}', space=vmem, size = 0x2000, scoped, tag = 'input window, operand 1, single buffered']
    #allocation6 [shape = 's32[1]{0}', space=sflag, size = 0x4, scoped, tag = 'scoped memory for tpu_custom_call.1']
    #allocation7 [shape = 'u8[8192]{0}', space=vmem, size = 0x2000, scoped, tag = 'input window, operand 2, single buffered']
    #allocation8 [shape = 'u8[16384]{0}', space=vmem, size = 0x4000, scoped, tag = 'input window, operand 3, single buffered']
    #allocation9 [shape = 's32[1]{0}', space=sflag, size = 0x4, scoped, tag = 'scoped memory for tpu_custom_call.1']
    #allocation10 [shape = 'u8[16384]{0}', space=vmem, size = 0x4000, scoped, tag = 'input window, operand 5, single buffered']
    #allocation11 [shape = 'u8[16384]{0}', space=vmem, size = 0x4000, scoped, tag = 'input window, operand 7, single buffered']
    #allocation12 [shape = 's32[1]{0}', space=sflag, size = 0x4, scoped, tag = 'scoped memory for tpu_custom_call.1']
    #allocation13 [shape = 'u8[16384]{0}', space=vmem, size = 0x4000, scoped, tag = 'input window, operand 9, single buffered']
    #allocation14 [shape = 'u8[8192]{0}', space=vmem, size = 0x2000, scoped, tag = 'output window, operand 0, single buffered']
    #allocation15 [shape = 'u8[8192]{0}', space=vmem, size = 0x2000, scoped, tag = 'output window, operand 1, single buffered']
    #allocation16 [shape = 's32[1]{0}', space=sflag, size = 0x4, scoped, tag = 'scoped memory for tpu_custom_call.1']
    %18 = vsyncpa [#allocation3], 0
    %19 = vsyncpa [#allocation6], 0
    %20 = vsyncpa [#allocation9], 0
    %21 = vsyncpa [#allocation12], 0
    %22 = vsyncpa [#allocation4], 0
    %23 = vsyncpa [#allocation16], 0
    // Predicated region
    $region2: #{tpu_custom_call.1} parent=1 // pred_check
      _
    $region3: #{tpu_custom_call.1} parent=1 // pred_check_branch
      %25 = sbr.rel (0) target = $region5
    $region4: #{tpu_custom_call.1} parent=1 // pred_region
      %27 = vsyncadd [#allocation3], 0
      %s28 = sshll.u32 %s0, 4
      %s29 = int_to_ptr.hbm [resolvable:$true] %s28
      %s30 = sshll.u32 [#allocation2], 4
      %s31 = int_to_ptr.vmem [resolvable:$true] %s30
      %36 = dma.hbm_to_vmem [thread:$0]  %s29, 256, %s31, [#allocation3], 128, 128, 8
    $region5: #{tpu_custom_call.1} parent=1 // pred_fallthru
      _
    // Predicated region
    $region6: #{tpu_custom_call.1} parent=1 // pred_check
      _
    $region7: #{tpu_custom_call.1} parent=1 // pred_check_branch
      %38 = sbr.rel (0) target = $region9
    $region8: #{tpu_custom_call.1} parent=1 // pred_region
      %40 = vsyncadd [#allocation6], 0
      %s41 = sshll.u32 %s1, 4
      %s42 = int_to_ptr.hbm [resolvable:$true] %s41
      %s43 = sshll.u32 [#allocation5], 4
      %s44 = int_to_ptr.vmem [resolvable:$true] %s43
      %49 = dma.hbm_to_vmem [thread:$0]  %s42, 256, %s44, [#allocation6], 128, 128, 8
    $region9: #{tpu_custom_call.1} parent=1 // pred_fallthru
      _
    // Predicated region
    $region10: #{tpu_custom_call.1} parent=1 // pred_check
      _
    $region11: #{tpu_custom_call.1} parent=1 // pred_check_branch
      %51 = sbr.rel (0) target = $region13
    $region12: #{tpu_custom_call.1} parent=1 // pred_region
      %53 = vsyncadd [#allocation6], 0
      %s54 = sshll.u32 %s2, 4
      %s55 = int_to_ptr.hbm [resolvable:$true] %s54
      %s56 = sshll.u32 [#allocation7], 4
      %s57 = int_to_ptr.vmem [resolvable:$true] %s56
      %62 = dma.hbm_to_vmem [thread:$0]  %s55, 256, %s57, [#allocation6], 128, 128, 8
    $region13: #{tpu_custom_call.1} parent=1 // pred_fallthru
      _
    // Predicated region
    $region14: #{tpu_custom_call.1} parent=1 // pred_check
      _
    $region15: #{tpu_custom_call.1} parent=1 // pred_check_branch
      %64 = sbr.rel (0) target = $region17
    $region16: #{tpu_custom_call.1} parent=1 // pred_region
      %66 = vsyncadd [#allocation9], 0
      %s67 = sshll.u32 %s3, 4
      %s68 = int_to_ptr.hbm [resolvable:$true] %s67
      %s69 = sshll.u32 [#allocation8], 4
      %s70 = int_to_ptr.vmem [resolvable:$true] %s69
      %75 = dma.hbm_to_vmem [thread:$0]  %s68, 512, %s70, [#allocation9], 128, 128, 8
    $region17: #{tpu_custom_call.1} parent=1 // pred_fallthru
      _
    // Predicated region
    $region18: #{tpu_custom_call.1} parent=1 // pred_check
      _
    $region19: #{tpu_custom_call.1} parent=1 // pred_check_branch
      %77 = sbr.rel (0) target = $region21
    $region20: #{tpu_custom_call.1} parent=1 // pred_region
      _
    $region21: #{tpu_custom_call.1} parent=1 // pred_fallthru
      _
    // Predicated region
    $region22: #{tpu_custom_call.1} parent=1 // pred_check
      _
    $region23: #{tpu_custom_call.1} parent=1 // pred_check_branch
      %79 = sbr.rel (0) target = $region25
    $region24: #{tpu_custom_call.1} parent=1 // pred_region
      %81 = vsyncadd [#allocation9], 0
      %s82 = sshll.u32 %s5, 4
      %s83 = int_to_ptr.hbm [resolvable:$true] %s82
      %s84 = sshll.u32 [#allocation10], 4
      %s85 = int_to_ptr.vmem [resolvable:$true] %s84
      %90 = dma.hbm_to_vmem [thread:$0]  %s83, 512, %s85, [#allocation9], 128, 128, 8
    $region25: #{tpu_custom_call.1} parent=1 // pred_fallthru
      _
    // Predicated region
    $region26: #{tpu_custom_call.1} parent=1 // pred_check
      _
    $region27: #{tpu_custom_call.1} parent=1 // pred_check_branch
      %92 = sbr.rel (0) target = $region29
    $region28: #{tpu_custom_call.1} parent=1 // pred_region
      _
    $region29: #{tpu_custom_call.1} parent=1 // pred_fallthru
      _
    // Predicated region
    $region30: #{tpu_custom_call.1} parent=1 // pred_check
      _
    $region31: #{tpu_custom_call.1} parent=1 // pred_check_branch
      %94 = sbr.rel (0) target = $region33
    $region32: #{tpu_custom_call.1} parent=1 // pred_region
      %96 = vsyncadd [#allocation12], 0
      %s97 = sshll.u32 %s7, 4
      %s98 = int_to_ptr.hbm [resolvable:$true] %s97
      %s99 = sshll.u32 [#allocation11], 4
      %s100 = int_to_ptr.vmem [resolvable:$true] %s99
      %105 = dma.hbm_to_vmem [thread:$0]  %s98, 512, %s100, [#allocation12], 128, 128, 8
    $region33: #{tpu_custom_call.1} parent=1 // pred_fallthru
      _
    // Predicated region
    $region34: #{tpu_custom_call.1} parent=1 // pred_check
      _
    $region35: #{tpu_custom_call.1} parent=1 // pred_check_branch
      %107 = sbr.rel (0) target = $region37
    $region36: #{tpu_custom_call.1} parent=1 // pred_region
      _
    $region37: #{tpu_custom_call.1} parent=1 // pred_fallthru
      _
    // Predicated region
    $region38: #{tpu_custom_call.1} parent=1 // pred_check
      _
    $region39: #{tpu_custom_call.1} parent=1 // pred_check_branch
      %109 = sbr.rel (0) target = $region41
    $region40: #{tpu_custom_call.1} parent=1 // pred_region
      %111 = vsyncadd [#allocation12], 0
      %s112 = sshll.u32 %s9, 4
      %s113 = int_to_ptr.hbm [resolvable:$true] %s112
      %s114 = sshll.u32 [#allocation13], 4
      %s115 = int_to_ptr.vmem [resolvable:$true] %s114
      %120 = dma.hbm_to_vmem [thread:$0]  %s113, 512, %s115, [#allocation12], 128, 128, 8
    $region41: #{tpu_custom_call.1} parent=1 // pred_fallthru
      _
    // Predicated region
    $region42: #{tpu_custom_call.1} parent=1 // pred_check
      _
    $region43: #{tpu_custom_call.1} parent=1 // pred_check_branch
      %122 = sbr.rel (0) target = $region45
    $region44: #{tpu_custom_call.1} parent=1 // pred_region
      _
    $region45: #{tpu_custom_call.1} parent=1 // pred_fallthru
      _
    // Predicated region
    $region46: #{tpu_custom_call.1} parent=1 // pred_check
      _
    $region47: #{tpu_custom_call.1} parent=1 // pred_check_branch
      %124 = sbr.rel (0) target = $region49
    $region48: #{tpu_custom_call.1} parent=1 // pred_region
      %126 = dma.done [#allocation3], 256
    $region49: #{tpu_custom_call.1} parent=1 // pred_fallthru
      _
    // Predicated region
    $region50: #{tpu_custom_call.1} parent=1 // pred_check
      _
    $region51: #{tpu_custom_call.1} parent=1 // pred_check_branch
      %128 = sbr.rel (0) target = $region53
    $region52: #{tpu_custom_call.1} parent=1 // pred_region
      %130 = dma.done [#allocation6], 256
    $region53: #{tpu_custom_call.1} parent=1 // pred_fallthru
      _
    // Predicated region
    $region54: #{tpu_custom_call.1} parent=1 // pred_check
      _
    $region55: #{tpu_custom_call.1} parent=1 // pred_check_branch
      %132 = sbr.rel (0) target = $region57
    $region56: #{tpu_custom_call.1} parent=1 // pred_region
      %134 = dma.done [#allocation6], 256
    $region57: #{tpu_custom_call.1} parent=1 // pred_fallthru
      _
    // Predicated region
    $region58: #{tpu_custom_call.1} parent=1 // pred_check
      _
    $region59: #{tpu_custom_call.1} parent=1 // pred_check_branch
      %136 = sbr.rel (0) target = $region61
    $region60: #{tpu_custom_call.1} parent=1 // pred_region
      %138 = dma.done [#allocation9], 512
    $region61: #{tpu_custom_call.1} parent=1 // pred_fallthru
      _
    // Predicated region
    $region62: #{tpu_custom_call.1} parent=1 // pred_check
      _
    $region63: #{tpu_custom_call.1} parent=1 // pred_check_branch
      %140 = sbr.rel (0) target = $region65
    $region64: #{tpu_custom_call.1} parent=1 // pred_region
      %142 = dma.done [#allocation9], 512
    $region65: #{tpu_custom_call.1} parent=1 // pred_fallthru
      _
    // Predicated region
    $region66: #{tpu_custom_call.1} parent=1 // pred_check
      _
    $region67: #{tpu_custom_call.1} parent=1 // pred_check_branch
      %144 = sbr.rel (0) target = $region69
    $region68: #{tpu_custom_call.1} parent=1 // pred_region
      %146 = dma.done [#allocation12], 512
    $region69: #{tpu_custom_call.1} parent=1 // pred_fallthru
      _
    // Predicated region
    $region70: #{tpu_custom_call.1} parent=1 // pred_check
      _
    $region71: #{tpu_custom_call.1} parent=1 // pred_check_branch
      %148 = sbr.rel (0) target = $region73
    $region72: #{tpu_custom_call.1} parent=1 // pred_region
      %150 = dma.done [#allocation12], 512
    $region73: #{tpu_custom_call.1} parent=1 // pred_fallthru
      _
    %v151 = vld [vmem:[#allocation2] sm:$0xff]
    %v152 = vld [vmem:[#allocation2 + $0x8] sm:$0xff]
    %v153 = vld [vmem:[#allocation5] sm:$0xff]
    %v154 = vld [vmem:[#allocation5 + $0x8] sm:$0xff]
    %v155 = vld [vmem:[#allocation7] sm:$0xff]
    %v156 = vld [vmem:[#allocation7 + $0x8] sm:$0xff]
    %v157 = vld [vmem:[#allocation8] sm:$0xff]
    %v158 = vld [vmem:[#allocation8 + $0x8] sm:$0xff]
    %v159 = vld [vmem:[#allocation8 + $0x10] sm:$0xff]
    %v160 = vld [vmem:[#allocation8 + $0x18] sm:$0xff]
    %v161 = vld [vmem:[%s4] sm:$0x1]
    %v163 = vperm.slane %v161, 0
    %vm165 = vcmask 261120
    %v167 = vsel %vm165, %v151, 0
    %v170 = vsel %vm165, %v152, 0
    %v173 = vsel %vm165, %v157, 0
    %v176 = vsel %vm165, %v158, 0
    %v179 = vsel %vm165, %v159, 0
    %v182 = vsel %vm165, %v160, 0
    %184 = vmatpush.xpose.msra.mxu0 0.0
    %185 = vmatpush.xpose.msra.mxu0 0.0
    %186 = vmatpush.xpose.msra.mxu0 0.0
    %187 = vmatpush.xpose.msra.mxu0 0.0
    %188 = vmatpush.xpose.msra.mxu0 0.0
    %189 = vmatpush.xpose.msra.mxu0 0.0
    %190 = vmatpush.xpose.msra.mxu0 0.0
    %191 = vmatpush.xpose.msra.mxu0 0.0
    %192 = vmatpush.xpose.msra.mxu0 0.0
    %193 = vmatpush.xpose.msra.mxu0 0.0
    %194 = vmatpush.xpose.msra.mxu0 0.0
    %195 = vmatpush.xpose.msra.mxu0 0.0
    %196 = vmatpush.xpose.msra.mxu0 %v182
    %197 = vmatpush.xpose.msra.mxu0 %v179
    %198 = vmatpush.xpose.msra.mxu0 %v176
    %199 = vmatpush.xpose.msra.mxu0 %v173
    %200 = vmatmul.f32.gmra.mxu0 %v167
    %v201 = vpop.f32.mrf.mxu0
    %v202 = vadd.f32 %v163, %v201
    %203 = vmatmul.f32.gmra.mxu0 %v170
    %v204 = vpop.f32.mrf.mxu0
    %v205 = vadd.f32 %v163, %v204
    %206 = vdwg.mxu0
    %v207 = vld [vmem:[#allocation10] sm:$0xff]
    %v208 = vld [vmem:[#allocation10 + $0x8] sm:$0xff]
    %v209 = vld [vmem:[#allocation10 + $0x10] sm:$0xff]
    %v210 = vld [vmem:[#allocation10 + $0x18] sm:$0xff]
    %v211 = vld [vmem:[%s6] sm:$0x1]
    %v213 = vperm.slane %v211, 0
    %v216 = vsel %vm165, %v153, 0
    %v219 = vsel %vm165, %v154, 0
    %v222 = vsel %vm165, %v207, 0
    %v225 = vsel %vm165, %v208, 0
    %v228 = vsel %vm165, %v209, 0
    %v231 = vsel %vm165, %v210, 0
    %233 = vmatpush.xpose.msra.mxu0 0.0
    %234 = vmatpush.xpose.msra.mxu0 0.0
    %235 = vmatpush.xpose.msra.mxu0 0.0
    %236 = vmatpush.xpose.msra.mxu0 0.0
    %237 = vmatpush.xpose.msra.mxu0 0.0
    %238 = vmatpush.xpose.msra.mxu0 0.0
    %239 = vmatpush.xpose.msra.mxu0 0.0
    %240 = vmatpush.xpose.msra.mxu0 0.0
    %241 = vmatpush.xpose.msra.mxu0 0.0
    %242 = vmatpush.xpose.msra.mxu0 0.0
    %243 = vmatpush.xpose.msra.mxu0 0.0
    %244 = vmatpush.xpose.msra.mxu0 0.0
    %245 = vmatpush.xpose.msra.mxu0 %v231
    %246 = vmatpush.xpose.msra.mxu0 %v228
    %247 = vmatpush.xpose.msra.mxu0 %v225
    %248 = vmatpush.xpose.msra.mxu0 %v222
    %249 = vmatmul.f32.gmra.mxu0 %v216
    %v250 = vpop.f32.mrf.mxu0
    %v251 = vadd.f32 %v213, %v250
    %252 = vmatmul.f32.gmra.mxu0 %v219
    %v253 = vpop.f32.mrf.mxu0
    %v254 = vadd.f32 %v213, %v253
    %255 = vdwg.mxu0
    %v256 = vld [vmem:[#allocation11] sm:$0xff]
    %v257 = vld [vmem:[#allocation11 + $0x8] sm:$0xff]
    %v258 = vld [vmem:[#allocation11 + $0x10] sm:$0xff]
    %v259 = vld [vmem:[#allocation11 + $0x18] sm:$0xff]
    %v260 = vld [vmem:[%s8] sm:$0x1]
    %v262 = vperm.slane %v260, 0
    %v265 = vsel %vm165, %v155, 0
    %v268 = vsel %vm165, %v156, 0
    %v271 = vsel %vm165, %v256, 0
    %v274 = vsel %vm165, %v257, 0
    %v277 = vsel %vm165, %v258, 0
    %v280 = vsel %vm165, %v259, 0
    %282 = vmatpush.xpose.msra.mxu0 0.0
    %283 = vmatpush.xpose.msra.mxu0 0.0
    %284 = vmatpush.xpose.msra.mxu0 0.0
    %285 = vmatpush.xpose.msra.mxu0 0.0
    %286 = vmatpush.xpose.msra.mxu0 0.0
    %287 = vmatpush.xpose.msra.mxu0 0.0
    %288 = vmatpush.xpose.msra.mxu0 0.0
    %289 = vmatpush.xpose.msra.mxu0 0.0
    %290 = vmatpush.xpose.msra.mxu0 0.0
    %291 = vmatpush.xpose.msra.mxu0 0.0
    %292 = vmatpush.xpose.msra.mxu0 0.0
    %293 = vmatpush.xpose.msra.mxu0 0.0
    %294 = vmatpush.xpose.msra.mxu0 %v280
    %295 = vmatpush.xpose.msra.mxu0 %v277
    %296 = vmatpush.xpose.msra.mxu0 %v274
    %297 = vmatpush.xpose.msra.mxu0 %v271
    %298 = vmatmul.f32.gmra.mxu0 %v265
    %v299 = vpop.f32.mrf.mxu0
    %v300 = vadd.f32 %v262, %v299
    %301 = vmatmul.f32.gmra.mxu0 %v268
    %v302 = vpop.f32.mrf.mxu0
    %v303 = vadd.f32 %v262, %v302
    %304 = vdwg.mxu0
    %v305 = vld [vmem:[#allocation13] sm:$0xff]
    %v306 = vld [vmem:[#allocation13 + $0x8] sm:$0xff]
    %v307 = vld [vmem:[#allocation13 + $0x10] sm:$0xff]
    %v308 = vld [vmem:[#allocation13 + $0x18] sm:$0xff]
    %v309 = vld [vmem:[%s10] sm:$0x1]
    %vm310 = vcmask 64512
    %v312 = vsel %vm310, %v202, 0
    %v315 = vsel %vm310, %v251, 0
    %317 = vmatpush.xpose.msra.mxu0 0.0
    %318 = vmatpush.xpose.msra.mxu0 0.0
    %319 = vmatpush.xpose.msra.mxu0 0.0
    %320 = vmatpush.xpose.msra.mxu0 0.0
    %321 = vmatpush.xpose.msra.mxu0 0.0
    %322 = vmatpush.xpose.msra.mxu0 0.0
    %323 = vmatpush.xpose.msra.mxu0 0.0
    %324 = vmatpush.xpose.msra.mxu0 0.0
    %325 = vmatpush.xpose.msra.mxu0 0.0
    %326 = vmatpush.xpose.msra.mxu0 0.0
    %327 = vmatpush.xpose.msra.mxu0 0.0
    %328 = vmatpush.xpose.msra.mxu0 0.0
    %329 = vmatpush.xpose.msra.mxu0 0.0
    %330 = vmatpush.xpose.msra.mxu0 0.0
    %331 = vmatpush.xpose.msra.mxu0 0.0
    %332 = vmatpush.xpose.msra.mxu0 %v315
    %333 = vmatmul.f32.gmra.mxu0 %v312
    %v334 = vpop.f32.mrf.mxu0
    %v335 = vadd.f32 0.0, %v334
    %336 = vdwg.mxu0
    %v337 = vsel %vm310, %v335, -inf
    %338 = vmax.xlane.f32.xlu0 %v337
    %v339 = vpop.xlane.xlu0 %338
    %v340 = vsub.f32 %v335, %v339
    %v341 = vmul.f32 %v340, 1.442695
    %v342 = vpow.pop %v341
    %v343 = vsel %vm310, %v342, 0.0
    %344 = vadd.xlane.f32.xlu0 %v343
    %v345 = vpop.xlane.xlu0 %344
    %v346 = vrcp.pop %v345
    %v347 = vmul.f32 %v345, %v346
    %v348 = vsub.f32 1.0, %v347
    %v349 = vmul.f32 %v346, %v348
    %v350 = vadd.f32 %v346, %v349
    %vm351 = vweird.f32 %v345
    %vm352 = vweird.f32 %v346
    %vm353 = vmor %vm351, %vm352
    %v354 = vsel %vm353, %v346, %v350
    %v355 = vand.u32 2147483647, %v345
    %vm356 = vcmp.eq.f32.partialorder %v355, 8.507059e+37
    %v357 = vand.u32 %v345, 2147483648
    %v358 = vor.u32 1.1754944e-38, %v357
    %v359 = vsel %vm356, %v358, %v354
    %v360 = vmul.f32 %v342, %v359
    %361 = vst.msk [vmem:[#allocation15] sm:$0xff] %vm310, %v360
    %v363 = vsel %vm310, %v360, 0
    %365 = vmatpush.msra.mxu0 0.0
    %366 = vmatpush.msra.mxu0 0.0
    %367 = vmatpush.msra.mxu0 0.0
    %368 = vmatpush.msra.mxu0 0.0
    %369 = vmatpush.msra.mxu0 0.0
    %370 = vmatpush.msra.mxu0 0.0
    %371 = vmatpush.msra.mxu0 0.0
    %372 = vmatpush.msra.mxu0 0.0
    %373 = vmatpush.msra.mxu0 0.0
    %374 = vmatpush.msra.mxu0 0.0
    %375 = vmatpush.msra.mxu0 0.0
    %376 = vmatpush.msra.mxu0 0.0
    %377 = vmatpush.msra.mxu0 0.0
    %378 = vmatpush.msra.mxu0 0.0
    %379 = vmatpush.msra.mxu0 0.0
    %380 = vmatpush.msra.mxu0 %v300
    %381 = vmatmul.f32.gmra.mxu0 %v363
    %v382 = vpop.f32.mrf.mxu0
    %v383 = vadd.f32 0.0, %v382
    %384 = vdwg.mxu0
    %385 = vrot.lane.b32.xlu0 %v202, 120
    %v386 = vpop.permute.xlu0 %385
    %387 = vrot.lane.b32.xlu0 %v251, 120
    %v388 = vpop.permute.xlu0 %387
    %v389 = vsel %vm310, %v386, 0
    %v391 = vsel %vm310, %v388, 0
    %393 = vmatpush.xpose.msra.mxu0 0.0
    %394 = vmatpush.xpose.msra.mxu0 0.0
    %395 = vmatpush.xpose.msra.mxu0 0.0
    %396 = vmatpush.xpose.msra.mxu0 0.0
    %397 = vmatpush.xpose.msra.mxu0 0.0
    %398 = vmatpush.xpose.msra.mxu0 0.0
    %399 = vmatpush.xpose.msra.mxu0 0.0
    %400 = vmatpush.xpose.msra.mxu0 0.0
    %401 = vmatpush.xpose.msra.mxu0 0.0
    %402 = vmatpush.xpose.msra.mxu0 0.0
    %403 = vmatpush.xpose.msra.mxu0 0.0
    %404 = vmatpush.xpose.msra.mxu0 0.0
    %405 = vmatpush.xpose.msra.mxu0 0.0
    %406 = vmatpush.xpose.msra.mxu0 0.0
    %407 = vmatpush.xpose.msra.mxu0 0.0
    %408 = vmatpush.xpose.msra.mxu0 %v391
    %409 = vmatmul.f32.gmra.mxu0 %v389
    %v410 = vpop.f32.mrf.mxu0
    %v411 = vadd.f32 0.0, %v410
    %412 = vdwg.mxu0
    %v413 = vsel %vm310, %v411, -inf
    %414 = vmax.xlane.f32.xlu0 %v413
    %v415 = vpop.xlane.xlu0 %414
    %v416 = vsub.f32 %v411, %v415
    %v417 = vmul.f32 %v416, 1.442695
    %v418 = vpow.pop %v417
    %v419 = vsel %vm310, %v418, 0.0
    %420 = vadd.xlane.f32.xlu0 %v419
    %v421 = vpop.xlane.xlu0 %420
    %v422 = vrcp.pop %v421
    %v423 = vmul.f32 %v421, %v422
    %v424 = vsub.f32 1.0, %v423
    %v425 = vmul.f32 %v422, %v424
    %v426 = vadd.f32 %v422, %v425
    %vm427 = vweird.f32 %v421
    %vm428 = vweird.f32 %v422
    %vm429 = vmor %vm427, %vm428
    %v430 = vsel %vm429, %v422, %v426
    %v431 = vand.u32 2147483647, %v421
    %vm432 = vcmp.eq.f32.partialorder %v431, 8.507059e+37
    %v433 = vand.u32 %v421, 2147483648
    %v434 = vor.u32 1.1754944e-38, %v433
    %v435 = vsel %vm432, %v434, %v430
    %v436 = vmul.f32 %v418, %v435
    %438 = vrot.lane.b32.xlu0 %v436, 8
    %v439 = vpop.permute.xlu0 %438
    %vm441 = vcmask 130112
    %442 = vst.msk [vmem:[#allocation15] sm:$0xff] %vm441, %v439
    %444 = vrot.lane.b32.xlu0 %v300, 120
    %v445 = vpop.permute.xlu0 %444
    %v447 = vsel %vm310, %v436, 0
    %449 = vmatpush.msra.mxu0 0.0
    %450 = vmatpush.msra.mxu0 0.0
    %451 = vmatpush.msra.mxu0 0.0
    %452 = vmatpush.msra.mxu0 0.0
    %453 = vmatpush.msra.mxu0 0.0
    %454 = vmatpush.msra.mxu0 0.0
    %455 = vmatpush.msra.mxu0 0.0
    %456 = vmatpush.msra.mxu0 0.0
    %457 = vmatpush.msra.mxu0 0.0
    %458 = vmatpush.msra.mxu0 0.0
    %459 = vmatpush.msra.mxu0 0.0
    %460 = vmatpush.msra.mxu0 0.0
    %461 = vmatpush.msra.mxu0 0.0
    %462 = vmatpush.msra.mxu0 0.0
    %463 = vmatpush.msra.mxu0 0.0
    %464 = vmatpush.msra.mxu0 %v445
    %465 = vmatmul.f32.gmra.mxu0 %v447
    %v466 = vpop.f32.mrf.mxu0
    %v467 = vadd.f32 0.0, %v466
    %468 = vdwg.mxu0
    %473 = vrot.lane.b32.xlu0 %v305, 120
    %v474 = vpop.permute.xlu0 %473
    %475 = vrot.lane.b32.xlu0 %v306, 120
    %v476 = vpop.permute.xlu0 %475
    %477 = vrot.lane.b32.xlu0 %v307, 120
    %v478 = vpop.permute.xlu0 %477
    %479 = vrot.lane.b32.xlu0 %v308, 120
    %v480 = vpop.permute.xlu0 %479
    %v482 = vsel %vm310, %v467, 0
    %v484 = vsel %vm310, %v474, 0
    %v486 = vsel %vm310, %v476, 0
    %v488 = vsel %vm310, %v478, 0
    %v490 = vsel %vm310, %v480, 0
    %492 = vmatpush.xpose.msra.mxu0 0.0
    %493 = vmatpush.xpose.msra.mxu0 0.0
    %494 = vmatpush.xpose.msra.mxu0 0.0
    %495 = vmatpush.xpose.msra.mxu0 0.0
    %496 = vmatpush.xpose.msra.mxu0 0.0
    %497 = vmatpush.xpose.msra.mxu0 0.0
    %498 = vmatpush.xpose.msra.mxu0 0.0
    %499 = vmatpush.xpose.msra.mxu0 0.0
    %500 = vmatpush.xpose.msra.mxu0 0.0
    %501 = vmatpush.xpose.msra.mxu0 0.0
    %502 = vmatpush.xpose.msra.mxu0 0.0
    %503 = vmatpush.xpose.msra.mxu0 0.0
    %504 = vmatpush.xpose.msra.mxu0 %v490
    %505 = vmatpush.xpose.msra.mxu0 %v488
    %506 = vmatpush.xpose.msra.mxu0 %v486
    %507 = vmatpush.xpose.msra.mxu0 %v484
    %508 = vmatmul.f32.gmra.mxu0 %v482
    %v509 = vpop.f32.mrf.mxu0
    %v510 = vadd.f32 0.0, %v509
    %511 = vdwg.mxu0
    %v513 = vsel %vm310, %v383, 0
    %v515 = vsel %vm310, %v305, 0
    %v517 = vsel %vm310, %v306, 0
    %v519 = vsel %vm310, %v307, 0
    %v521 = vsel %vm310, %v308, 0
    %523 = vmatpush.xpose.msra.mxu0 0.0
    %524 = vmatpush.xpose.msra.mxu0 0.0
    %525 = vmatpush.xpose.msra.mxu0 0.0
    %526 = vmatpush.xpose.msra.mxu0 0.0
    %527 = vmatpush.xpose.msra.mxu0 0.0
    %528 = vmatpush.xpose.msra.mxu0 0.0
    %529 = vmatpush.xpose.msra.mxu0 0.0
    %530 = vmatpush.xpose.msra.mxu0 0.0
    %531 = vmatpush.xpose.msra.mxu0 0.0
    %532 = vmatpush.xpose.msra.mxu0 0.0
    %533 = vmatpush.xpose.msra.mxu0 0.0
    %534 = vmatpush.xpose.msra.mxu0 0.0
    %535 = vmatpush.xpose.msra.mxu0 %v521
    %536 = vmatpush.xpose.msra.mxu0 %v519
    %537 = vmatpush.xpose.msra.mxu0 %v517
    %538 = vmatpush.xpose.msra.mxu0 %v515
    %539 = vmatmul.f32.gmra.mxu0 %v513
    %v540 = vpop.f32.mrf.mxu0
    %v541 = vadd.f32 %v510, %v540
    %542 = vdwg.mxu0
    %543 = vrot.lane.b32.xlu0 %v202, 112
    %v544 = vpop.permute.xlu0 %543
    %545 = vrot.lane.b32.xlu0 %v251, 112
    %v546 = vpop.permute.xlu0 %545
    %v547 = vsel %vm310, %v544, 0
    %v549 = vsel %vm310, %v546, 0
    %551 = vmatpush.xpose.msra.mxu0 0.0
    %552 = vmatpush.xpose.msra.mxu0 0.0
    %553 = vmatpush.xpose.msra.mxu0 0.0
    %554 = vmatpush.xpose.msra.mxu0 0.0
    %555 = vmatpush.xpose.msra.mxu0 0.0
    %556 = vmatpush.xpose.msra.mxu0 0.0
    %557 = vmatpush.xpose.msra.mxu0 0.0
    %558 = vmatpush.xpose.msra.mxu0 0.0
    %559 = vmatpush.xpose.msra.mxu0 0.0
    %560 = vmatpush.xpose.msra.mxu0 0.0
    %561 = vmatpush.xpose.msra.mxu0 0.0
    %562 = vmatpush.xpose.msra.mxu0 0.0
    %563 = vmatpush.xpose.msra.mxu0 0.0
    %564 = vmatpush.xpose.msra.mxu0 0.0
    %565 = vmatpush.xpose.msra.mxu0 0.0
    %566 = vmatpush.xpose.msra.mxu0 %v549
    %567 = vmatmul.f32.gmra.mxu0 %v547
    %v568 = vpop.f32.mrf.mxu0
    %v569 = vadd.f32 0.0, %v568
    %570 = vdwg.mxu0
    %v571 = vsel %vm310, %v569, -inf
    %572 = vmax.xlane.f32.xlu0 %v571
    %v573 = vpop.xlane.xlu0 %572
    %v574 = vsub.f32 %v569, %v573
    %v575 = vmul.f32 %v574, 1.442695
    %v576 = vpow.pop %v575
    %v577 = vsel %vm310, %v576, 0.0
    %578 = vadd.xlane.f32.xlu0 %v577
    %v579 = vpop.xlane.xlu0 %578
    %v580 = vrcp.pop %v579
    %v581 = vmul.f32 %v579, %v580
    %v582 = vsub.f32 1.0, %v581
    %v583 = vmul.f32 %v580, %v582
    %v584 = vadd.f32 %v580, %v583
    %vm585 = vweird.f32 %v579
    %vm586 = vweird.f32 %v580
    %vm587 = vmor %vm585, %vm586
    %v588 = vsel %vm587, %v580, %v584
    %v589 = vand.u32 2147483647, %v579
    %vm590 = vcmp.eq.f32.partialorder %v589, 8.507059e+37
    %v591 = vand.u32 %v579, 2147483648
    %v592 = vor.u32 1.1754944e-38, %v591
    %v593 = vsel %vm590, %v592, %v588
    %v594 = vmul.f32 %v576, %v593
    %596 = vrot.lane.b32.xlu0 %v594, 16
    %v597 = vpop.permute.xlu0 %596
    %vm599 = vcmask 195712
    %600 = vst.msk [vmem:[#allocation15] sm:$0xff] %vm599, %v597
    %601 = vrot.lane.b32.xlu0 %v300, 112
    %v602 = vpop.permute.xlu0 %601
    %v604 = vsel %vm310, %v594, 0
    %606 = vmatpush.msra.mxu0 0.0
    %607 = vmatpush.msra.mxu0 0.0
    %608 = vmatpush.msra.mxu0 0.0
    %609 = vmatpush.msra.mxu0 0.0
    %610 = vmatpush.msra.mxu0 0.0
    %611 = vmatpush.msra.mxu0 0.0
    %612 = vmatpush.msra.mxu0 0.0
    %613 = vmatpush.msra.mxu0 0.0
    %614 = vmatpush.msra.mxu0 0.0
    %615 = vmatpush.msra.mxu0 0.0
    %616 = vmatpush.msra.mxu0 0.0
    %617 = vmatpush.msra.mxu0 0.0
    %618 = vmatpush.msra.mxu0 0.0
    %619 = vmatpush.msra.mxu0 0.0
    %620 = vmatpush.msra.mxu0 0.0
    %621 = vmatpush.msra.mxu0 %v602
    %622 = vmatmul.f32.gmra.mxu0 %v604
    %v623 = vpop.f32.mrf.mxu0
    %v624 = vadd.f32 0.0, %v623
    %625 = vdwg.mxu0
    %626 = vrot.lane.b32.xlu0 %v305, 112
    %v627 = vpop.permute.xlu0 %626
    %628 = vrot.lane.b32.xlu0 %v306, 112
    %v629 = vpop.permute.xlu0 %628
    %630 = vrot.lane.b32.xlu0 %v307, 112
    %v631 = vpop.permute.xlu0 %630
    %632 = vrot.lane.b32.xlu0 %v308, 112
    %v633 = vpop.permute.xlu0 %632
    %v635 = vsel %vm310, %v624, 0
    %v637 = vsel %vm310, %v627, 0
    %v639 = vsel %vm310, %v629, 0
    %v641 = vsel %vm310, %v631, 0
    %v643 = vsel %vm310, %v633, 0
    %645 = vmatpush.xpose.msra.mxu0 0.0
    %646 = vmatpush.xpose.msra.mxu0 0.0
    %647 = vmatpush.xpose.msra.mxu0 0.0
    %648 = vmatpush.xpose.msra.mxu0 0.0
    %649 = vmatpush.xpose.msra.mxu0 0.0
    %650 = vmatpush.xpose.msra.mxu0 0.0
    %651 = vmatpush.xpose.msra.mxu0 0.0
    %652 = vmatpush.xpose.msra.mxu0 0.0
    %653 = vmatpush.xpose.msra.mxu0 0.0
    %654 = vmatpush.xpose.msra.mxu0 0.0
    %655 = vmatpush.xpose.msra.mxu0 0.0
    %656 = vmatpush.xpose.msra.mxu0 0.0
    %657 = vmatpush.xpose.msra.mxu0 %v643
    %658 = vmatpush.xpose.msra.mxu0 %v641
    %659 = vmatpush.xpose.msra.mxu0 %v639
    %660 = vmatpush.xpose.msra.mxu0 %v637
    %661 = vmatmul.f32.gmra.mxu0 %v635
    %v662 = vpop.f32.mrf.mxu0
    %v663 = vadd.f32 0.0, %v662
    %664 = vdwg.mxu0
    %v665 = vadd.f32 %v541, %v663
    %666 = vrot.lane.b32.xlu0 %v202, 104
    %v667 = vpop.permute.xlu0 %666
    %668 = vrot.lane.b32.xlu0 %v251, 104
    %v669 = vpop.permute.xlu0 %668
    %v670 = vsel %vm310, %v667, 0
    %v672 = vsel %vm310, %v669, 0
    %674 = vmatpush.xpose.msra.mxu0 0.0
    %675 = vmatpush.xpose.msra.mxu0 0.0
    %676 = vmatpush.xpose.msra.mxu0 0.0
    %677 = vmatpush.xpose.msra.mxu0 0.0
    %678 = vmatpush.xpose.msra.mxu0 0.0
    %679 = vmatpush.xpose.msra.mxu0 0.0
    %680 = vmatpush.xpose.msra.mxu0 0.0
    %681 = vmatpush.xpose.msra.mxu0 0.0
    %682 = vmatpush.xpose.msra.mxu0 0.0
    %683 = vmatpush.xpose.msra.mxu0 0.0
    %684 = vmatpush.xpose.msra.mxu0 0.0
    %685 = vmatpush.xpose.msra.mxu0 0.0
    %686 = vmatpush.xpose.msra.mxu0 0.0
    %687 = vmatpush.xpose.msra.mxu0 0.0
    %688 = vmatpush.xpose.msra.mxu0 0.0
    %689 = vmatpush.xpose.msra.mxu0 %v672
    %690 = vmatmul.f32.gmra.mxu0 %v670
    %v691 = vpop.f32.mrf.mxu0
    %v692 = vadd.f32 0.0, %v691
    %693 = vdwg.mxu0
    %v694 = vsel %vm310, %v692, -inf
    %695 = vmax.xlane.f32.xlu0 %v694
    %v696 = vpop.xlane.xlu0 %695
    %v697 = vsub.f32 %v692, %v696
    %v698 = vmul.f32 %v697, 1.442695
    %v699 = vpow.pop %v698
    %v700 = vsel %vm310, %v699, 0.0
    %701 = vadd.xlane.f32.xlu0 %v700
    %v702 = vpop.xlane.xlu0 %701
    %v703 = vrcp.pop %v702
    %v704 = vmul.f32 %v702, %v703
    %v705 = vsub.f32 1.0, %v704
    %v706 = vmul.f32 %v703, %v705
    %v707 = vadd.f32 %v703, %v706
    %vm708 = vweird.f32 %v702
    %vm709 = vweird.f32 %v703
    %vm710 = vmor %vm708, %vm709
    %v711 = vsel %vm710, %v703, %v707
    %v712 = vand.u32 2147483647, %v702
    %vm713 = vcmp.eq.f32.partialorder %v712, 8.507059e+37
    %v714 = vand.u32 %v702, 2147483648
    %v715 = vor.u32 1.1754944e-38, %v714
    %v716 = vsel %vm713, %v715, %v711
    %v717 = vmul.f32 %v699, %v716
    %719 = vrot.lane.b32.xlu0 %v717, 24
    %v720 = vpop.permute.xlu0 %719
    %vm722 = vcmask 261312
    %723 = vst.msk [vmem:[#allocation15] sm:$0xff] %vm722, %v720
    %724 = vrot.lane.b32.xlu0 %v300, 104
    %v725 = vpop.permute.xlu0 %724
    %v727 = vsel %vm310, %v717, 0
    %729 = vmatpush.msra.mxu0 0.0
    %730 = vmatpush.msra.mxu0 0.0
    %731 = vmatpush.msra.mxu0 0.0
    %732 = vmatpush.msra.mxu0 0.0
    %733 = vmatpush.msra.mxu0 0.0
    %734 = vmatpush.msra.mxu0 0.0
    %735 = vmatpush.msra.mxu0 0.0
    %736 = vmatpush.msra.mxu0 0.0
    %737 = vmatpush.msra.mxu0 0.0
    %738 = vmatpush.msra.mxu0 0.0
    %739 = vmatpush.msra.mxu0 0.0
    %740 = vmatpush.msra.mxu0 0.0
    %741 = vmatpush.msra.mxu0 0.0
    %742 = vmatpush.msra.mxu0 0.0
    %743 = vmatpush.msra.mxu0 0.0
    %744 = vmatpush.msra.mxu0 %v725
    %745 = vmatmul.f32.gmra.mxu0 %v727
    %v746 = vpop.f32.mrf.mxu0
    %v747 = vadd.f32 0.0, %v746
    %748 = vdwg.mxu0
    %749 = vrot.lane.b32.xlu0 %v305, 104
    %v750 = vpop.permute.xlu0 %749
    %751 = vrot.lane.b32.xlu0 %v306, 104
    %v752 = vpop.permute.xlu0 %751
    %753 = vrot.lane.b32.xlu0 %v307, 104
    %v754 = vpop.permute.xlu0 %753
    %755 = vrot.lane.b32.xlu0 %v308, 104
    %v756 = vpop.permute.xlu0 %755
    %v758 = vsel %vm310, %v747, 0
    %v760 = vsel %vm310, %v750, 0
    %v762 = vsel %vm310, %v752, 0
    %v764 = vsel %vm310, %v754, 0
    %v766 = vsel %vm310, %v756, 0
    %768 = vmatpush.xpose.msra.mxu0 0.0
    %769 = vmatpush.xpose.msra.mxu0 0.0
    %770 = vmatpush.xpose.msra.mxu0 0.0
    %771 = vmatpush.xpose.msra.mxu0 0.0
    %772 = vmatpush.xpose.msra.mxu0 0.0
    %773 = vmatpush.xpose.msra.mxu0 0.0
    %774 = vmatpush.xpose.msra.mxu0 0.0
    %775 = vmatpush.xpose.msra.mxu0 0.0
    %776 = vmatpush.xpose.msra.mxu0 0.0
    %777 = vmatpush.xpose.msra.mxu0 0.0
    %778 = vmatpush.xpose.msra.mxu0 0.0
    %779 = vmatpush.xpose.msra.mxu0 0.0
    %780 = vmatpush.xpose.msra.mxu0 %v766
    %781 = vmatpush.xpose.msra.mxu0 %v764
    %782 = vmatpush.xpose.msra.mxu0 %v762
    %783 = vmatpush.xpose.msra.mxu0 %v760
    %784 = vmatmul.f32.gmra.mxu0 %v758
    %v785 = vpop.f32.mrf.mxu0
    %v786 = vadd.f32 0.0, %v785
    %787 = vdwg.mxu0
    %v788 = vadd.f32 %v665, %v786
    %v790 = vperm.slane %v309, 0
    %v792 = vadd.f32 %v788, %v790
    %793 = vst.msk [vmem:[#allocation14] sm:$0xff] %vm165, %v792
    %v795 = vsel %vm310, %v205, 0
    %v798 = vsel %vm310, %v254, 0
    %800 = vmatpush.xpose.msra.mxu0 0.0
    %801 = vmatpush.xpose.msra.mxu0 0.0
    %802 = vmatpush.xpose.msra.mxu0 0.0
    %803 = vmatpush.xpose.msra.mxu0 0.0
    %804 = vmatpush.xpose.msra.mxu0 0.0
    %805 = vmatpush.xpose.msra.mxu0 0.0
    %806 = vmatpush.xpose.msra.mxu0 0.0
    %807 = vmatpush.xpose.msra.mxu0 0.0
    %808 = vmatpush.xpose.msra.mxu0 0.0
    %809 = vmatpush.xpose.msra.mxu0 0.0
    %810 = vmatpush.xpose.msra.mxu0 0.0
    %811 = vmatpush.xpose.msra.mxu0 0.0
    %812 = vmatpush.xpose.msra.mxu0 0.0
    %813 = vmatpush.xpose.msra.mxu0 0.0
    %814 = vmatpush.xpose.msra.mxu0 0.0
    %815 = vmatpush.xpose.msra.mxu0 %v798
    %816 = vmatmul.f32.gmra.mxu0 %v795
    %v817 = vpop.f32.mrf.mxu0
    %v818 = vadd.f32 0.0, %v817
    %819 = vdwg.mxu0
    %v820 = vsel %vm310, %v818, -inf
    %821 = vmax.xlane.f32.xlu0 %v820
    %v822 = vpop.xlane.xlu0 %821
    %v823 = vsub.f32 %v818, %v822
    %v824 = vmul.f32 %v823, 1.442695
    %v825 = vpow.pop %v824
    %v826 = vsel %vm310, %v825, 0.0
    %827 = vadd.xlane.f32.xlu0 %v826
    %v828 = vpop.xlane.xlu0 %827
    %v829 = vrcp.pop %v828
    %v830 = vmul.f32 %v828, %v829
    %v831 = vsub.f32 1.0, %v830
    %v832 = vmul.f32 %v829, %v831
    %v833 = vadd.f32 %v829, %v832
    %vm834 = vweird.f32 %v828
    %vm835 = vweird.f32 %v829
    %vm836 = vmor %vm834, %vm835
    %v837 = vsel %vm836, %v829, %v833
    %v838 = vand.u32 2147483647, %v828
    %vm839 = vcmp.eq.f32.partialorder %v838, 8.507059e+37
    %v840 = vand.u32 %v828, 2147483648
    %v841 = vor.u32 1.1754944e-38, %v840
    %v842 = vsel %vm839, %v841, %v837
    %v843 = vmul.f32 %v825, %v842
    %844 = vst.msk [vmem:[#allocation15 + $0x8] sm:$0xff] %vm310, %v843
    %v846 = vsel %vm310, %v843, 0
    %848 = vmatpush.msra.mxu0 0.0
    %849 = vmatpush.msra.mxu0 0.0
    %850 = vmatpush.msra.mxu0 0.0
    %851 = vmatpush.msra.mxu0 0.0
    %852 = vmatpush.msra.mxu0 0.0
    %853 = vmatpush.msra.mxu0 0.0
    %854 = vmatpush.msra.mxu0 0.0
    %855 = vmatpush.msra.mxu0 0.0
    %856 = vmatpush.msra.mxu0 0.0
    %857 = vmatpush.msra.mxu0 0.0
    %858 = vmatpush.msra.mxu0 0.0
    %859 = vmatpush.msra.mxu0 0.0
    %860 = vmatpush.msra.mxu0 0.0
    %861 = vmatpush.msra.mxu0 0.0
    %862 = vmatpush.msra.mxu0 0.0
    %863 = vmatpush.msra.mxu0 %v303
    %864 = vmatmul.f32.gmra.mxu0 %v846
    %v865 = vpop.f32.mrf.mxu0
    %v866 = vadd.f32 0.0, %v865
    %867 = vdwg.mxu0
    %868 = vrot.lane.b32.xlu0 %v205, 120
    %v869 = vpop.permute.xlu0 %868
    %870 = vrot.lane.b32.xlu0 %v254, 120
    %v871 = vpop.permute.xlu0 %870
    %v872 = vsel %vm310, %v869, 0
    %v874 = vsel %vm310, %v871, 0
    %876 = vmatpush.xpose.msra.mxu0 0.0
    %877 = vmatpush.xpose.msra.mxu0 0.0
    %878 = vmatpush.xpose.msra.mxu0 0.0
    %879 = vmatpush.xpose.msra.mxu0 0.0
    %880 = vmatpush.xpose.msra.mxu0 0.0
    %881 = vmatpush.xpose.msra.mxu0 0.0
    %882 = vmatpush.xpose.msra.mxu0 0.0
    %883 = vmatpush.xpose.msra.mxu0 0.0
    %884 = vmatpush.xpose.msra.mxu0 0.0
    %885 = vmatpush.xpose.msra.mxu0 0.0
    %886 = vmatpush.xpose.msra.mxu0 0.0
    %887 = vmatpush.xpose.msra.mxu0 0.0
    %888 = vmatpush.xpose.msra.mxu0 0.0
    %889 = vmatpush.xpose.msra.mxu0 0.0
    %890 = vmatpush.xpose.msra.mxu0 0.0
    %891 = vmatpush.xpose.msra.mxu0 %v874
    %892 = vmatmul.f32.gmra.mxu0 %v872
    %v893 = vpop.f32.mrf.mxu0
    %v894 = vadd.f32 0.0, %v893
    %895 = vdwg.mxu0
    %v896 = vsel %vm310, %v894, -inf
    %897 = vmax.xlane.f32.xlu0 %v896
    %v898 = vpop.xlane.xlu0 %897
    %v899 = vsub.f32 %v894, %v898
    %v900 = vmul.f32 %v899, 1.442695
    %v901 = vpow.pop %v900
    %v902 = vsel %vm310, %v901, 0.0
    %903 = vadd.xlane.f32.xlu0 %v902
    %v904 = vpop.xlane.xlu0 %903
    %v905 = vrcp.pop %v904
    %v906 = vmul.f32 %v904, %v905
    %v907 = vsub.f32 1.0, %v906
    %v908 = vmul.f32 %v905, %v907
    %v909 = vadd.f32 %v905, %v908
    %vm910 = vweird.f32 %v904
    %vm911 = vweird.f32 %v905
    %vm912 = vmor %vm910, %vm911
    %v913 = vsel %vm912, %v905, %v909
    %v914 = vand.u32 2147483647, %v904
    %vm915 = vcmp.eq.f32.partialorder %v914, 8.507059e+37
    %v916 = vand.u32 %v904, 2147483648
    %v917 = vor.u32 1.1754944e-38, %v916
    %v918 = vsel %vm915, %v917, %v913
    %v919 = vmul.f32 %v901, %v918
    %921 = vrot.lane.b32.xlu0 %v919, 8
    %v922 = vpop.permute.xlu0 %921
    %924 = vst.msk [vmem:[#allocation15 + $0x8] sm:$0xff] %vm441, %v922
    %926 = vrot.lane.b32.xlu0 %v303, 120
    %v927 = vpop.permute.xlu0 %926
    %v929 = vsel %vm310, %v919, 0
    %931 = vmatpush.msra.mxu0 0.0
    %932 = vmatpush.msra.mxu0 0.0
    %933 = vmatpush.msra.mxu0 0.0
    %934 = vmatpush.msra.mxu0 0.0
    %935 = vmatpush.msra.mxu0 0.0
    %936 = vmatpush.msra.mxu0 0.0
    %937 = vmatpush.msra.mxu0 0.0
    %938 = vmatpush.msra.mxu0 0.0
    %939 = vmatpush.msra.mxu0 0.0
    %940 = vmatpush.msra.mxu0 0.0
    %941 = vmatpush.msra.mxu0 0.0
    %942 = vmatpush.msra.mxu0 0.0
    %943 = vmatpush.msra.mxu0 0.0
    %944 = vmatpush.msra.mxu0 0.0
    %945 = vmatpush.msra.mxu0 0.0
    %946 = vmatpush.msra.mxu0 %v927
    %947 = vmatmul.f32.gmra.mxu0 %v929
    %v948 = vpop.f32.mrf.mxu0
    %v949 = vadd.f32 0.0, %v948
    %950 = vdwg.mxu0
    %v952 = vsel %vm310, %v949, 0
    %954 = vmatpush.xpose.msra.mxu0 0.0
    %955 = vmatpush.xpose.msra.mxu0 0.0
    %956 = vmatpush.xpose.msra.mxu0 0.0
    %957 = vmatpush.xpose.msra.mxu0 0.0
    %958 = vmatpush.xpose.msra.mxu0 0.0
    %959 = vmatpush.xpose.msra.mxu0 0.0
    %960 = vmatpush.xpose.msra.mxu0 0.0
    %961 = vmatpush.xpose.msra.mxu0 0.0
    %962 = vmatpush.xpose.msra.mxu0 0.0
    %963 = vmatpush.xpose.msra.mxu0 0.0
    %964 = vmatpush.xpose.msra.mxu0 0.0
    %965 = vmatpush.xpose.msra.mxu0 0.0
    %966 = vmatpush.xpose.msra.mxu0 %v490
    %967 = vmatpush.xpose.msra.mxu0 %v488
    %968 = vmatpush.xpose.msra.mxu0 %v486
    %969 = vmatpush.xpose.msra.mxu0 %v484
    %970 = vmatmul.f32.gmra.mxu0 %v952
    %v971 = vpop.f32.mrf.mxu0
    %v972 = vadd.f32 0.0, %v971
    %973 = vdwg.mxu0
    %v975 = vsel %vm310, %v866, 0
    %977 = vmatpush.xpose.msra.mxu0 0.0
    %978 = vmatpush.xpose.msra.mxu0 0.0
    %979 = vmatpush.xpose.msra.mxu0 0.0
    %980 = vmatpush.xpose.msra.mxu0 0.0
    %981 = vmatpush.xpose.msra.mxu0 0.0
    %982 = vmatpush.xpose.msra.mxu0 0.0
    %983 = vmatpush.xpose.msra.mxu0 0.0
    %984 = vmatpush.xpose.msra.mxu0 0.0
    %985 = vmatpush.xpose.msra.mxu0 0.0
    %986 = vmatpush.xpose.msra.mxu0 0.0
    %987 = vmatpush.xpose.msra.mxu0 0.0
    %988 = vmatpush.xpose.msra.mxu0 0.0
    %989 = vmatpush.xpose.msra.mxu0 %v521
    %990 = vmatpush.xpose.msra.mxu0 %v519
    %991 = vmatpush.xpose.msra.mxu0 %v517
    %992 = vmatpush.xpose.msra.mxu0 %v515
    %993 = vmatmul.f32.gmra.mxu0 %v975
    %v994 = vpop.f32.mrf.mxu0
    %v995 = vadd.f32 %v972, %v994
    %996 = vdwg.mxu0
    %997 = vrot.lane.b32.xlu0 %v205, 112
    %v998 = vpop.permute.xlu0 %997
    %999 = vrot.lane.b32.xlu0 %v254, 112
    %v1000 = vpop.permute.xlu0 %999
    %v1001 = vsel %vm310, %v998, 0
    %v1003 = vsel %vm310, %v1000, 0
    %1005 = vmatpush.xpose.msra.mxu0 0.0
    %1006 = vmatpush.xpose.msra.mxu0 0.0
    %1007 = vmatpush.xpose.msra.mxu0 0.0
    %1008 = vmatpush.xpose.msra.mxu0 0.0
    %1009 = vmatpush.xpose.msra.mxu0 0.0
    %1010 = vmatpush.xpose.msra.mxu0 0.0
    %1011 = vmatpush.xpose.msra.mxu0 0.0
    %1012 = vmatpush.xpose.msra.mxu0 0.0
    %1013 = vmatpush.xpose.msra.mxu0 0.0
    %1014 = vmatpush.xpose.msra.mxu0 0.0
    %1015 = vmatpush.xpose.msra.mxu0 0.0
    %1016 = vmatpush.xpose.msra.mxu0 0.0
    %1017 = vmatpush.xpose.msra.mxu0 0.0
    %1018 = vmatpush.xpose.msra.mxu0 0.0
    %1019 = vmatpush.xpose.msra.mxu0 0.0
    %1020 = vmatpush.xpose.msra.mxu0 %v1003
    %1021 = vmatmul.f32.gmra.mxu0 %v1001
    %v1022 = vpop.f32.mrf.mxu0
    %v1023 = vadd.f32 0.0, %v1022
    %1024 = vdwg.mxu0
    %v1025 = vsel %vm310, %v1023, -inf
    %1026 = vmax.xlane.f32.xlu0 %v1025
    %v1027 = vpop.xlane.xlu0 %1026
    %v1028 = vsub.f32 %v1023, %v1027
    %v1029 = vmul.f32 %v1028, 1.442695
    %v1030 = vpow.pop %v1029
    %v1031 = vsel %vm310, %v1030, 0.0
    %1032 = vadd.xlane.f32.xlu0 %v1031
    %v1033 = vpop.xlane.xlu0 %1032
    %v1034 = vrcp.pop %v1033
    %v1035 = vmul.f32 %v1033, %v1034
    %v1036 = vsub.f32 1.0, %v1035
    %v1037 = vmul.f32 %v1034, %v1036
    %v1038 = vadd.f32 %v1034, %v1037
    %vm1039 = vweird.f32 %v1033
    %vm1040 = vweird.f32 %v1034
    %vm1041 = vmor %vm1039, %vm1040
    %v1042 = vsel %vm1041, %v1034, %v1038
    %v1043 = vand.u32 2147483647, %v1033
    %vm1044 = vcmp.eq.f32.partialorder %v1043, 8.507059e+37
    %v1045 = vand.u32 %v1033, 2147483648
    %v1046 = vor.u32 1.1754944e-38, %v1045
    %v1047 = vsel %vm1044, %v1046, %v1042
    %v1048 = vmul.f32 %v1030, %v1047
    %1050 = vrot.lane.b32.xlu0 %v1048, 16
    %v1051 = vpop.permute.xlu0 %1050
    %1053 = vst.msk [vmem:[#allocation15 + $0x8] sm:$0xff] %vm599, %v1051
    %1054 = vrot.lane.b32.xlu0 %v303, 112
    %v1055 = vpop.permute.xlu0 %1054
    %v1057 = vsel %vm310, %v1048, 0
    %1059 = vmatpush.msra.mxu0 0.0
    %1060 = vmatpush.msra.mxu0 0.0
    %1061 = vmatpush.msra.mxu0 0.0
    %1062 = vmatpush.msra.mxu0 0.0
    %1063 = vmatpush.msra.mxu0 0.0
    %1064 = vmatpush.msra.mxu0 0.0
    %1065 = vmatpush.msra.mxu0 0.0
    %1066 = vmatpush.msra.mxu0 0.0
    %1067 = vmatpush.msra.mxu0 0.0
    %1068 = vmatpush.msra.mxu0 0.0
    %1069 = vmatpush.msra.mxu0 0.0
    %1070 = vmatpush.msra.mxu0 0.0
    %1071 = vmatpush.msra.mxu0 0.0
    %1072 = vmatpush.msra.mxu0 0.0
    %1073 = vmatpush.msra.mxu0 0.0
    %1074 = vmatpush.msra.mxu0 %v1055
    %1075 = vmatmul.f32.gmra.mxu0 %v1057
    %v1076 = vpop.f32.mrf.mxu0
    %v1077 = vadd.f32 0.0, %v1076
    %1078 = vdwg.mxu0
    %v1080 = vsel %vm310, %v1077, 0
    %1082 = vmatpush.xpose.msra.mxu0 0.0
    %1083 = vmatpush.xpose.msra.mxu0 0.0
    %1084 = vmatpush.xpose.msra.mxu0 0.0
    %1085 = vmatpush.xpose.msra.mxu0 0.0
    %1086 = vmatpush.xpose.msra.mxu0 0.0
    %1087 = vmatpush.xpose.msra.mxu0 0.0
    %1088 = vmatpush.xpose.msra.mxu0 0.0
    %1089 = vmatpush.xpose.msra.mxu0 0.0
    %1090 = vmatpush.xpose.msra.mxu0 0.0
    %1091 = vmatpush.xpose.msra.mxu0 0.0
    %1092 = vmatpush.xpose.msra.mxu0 0.0
    %1093 = vmatpush.xpose.msra.mxu0 0.0
    %1094 = vmatpush.xpose.msra.mxu0 %v643
    %1095 = vmatpush.xpose.msra.mxu0 %v641
    %1096 = vmatpush.xpose.msra.mxu0 %v639
    %1097 = vmatpush.xpose.msra.mxu0 %v637
    %1098 = vmatmul.f32.gmra.mxu0 %v1080
    %v1099 = vpop.f32.mrf.mxu0
    %v1100 = vadd.f32 0.0, %v1099
    %1101 = vdwg.mxu0
    %v1102 = vadd.f32 %v995, %v1100
    %1103 = vrot.lane.b32.xlu0 %v205, 104
    %v1104 = vpop.permute.xlu0 %1103
    %1105 = vrot.lane.b32.xlu0 %v254, 104
    %v1106 = vpop.permute.xlu0 %1105
    %v1107 = vsel %vm310, %v1104, 0
    %v1109 = vsel %vm310, %v1106, 0
    %1111 = vmatpush.xpose.msra.mxu0 0.0
    %1112 = vmatpush.xpose.msra.mxu0 0.0
    %1113 = vmatpush.xpose.msra.mxu0 0.0
    %1114 = vmatpush.xpose.msra.mxu0 0.0
    %1115 = vmatpush.xpose.msra.mxu0 0.0
    %1116 = vmatpush.xpose.msra.mxu0 0.0
    %1117 = vmatpush.xpose.msra.mxu0 0.0
    %1118 = vmatpush.xpose.msra.mxu0 0.0
    %1119 = vmatpush.xpose.msra.mxu0 0.0
    %1120 = vmatpush.xpose.msra.mxu0 0.0
    %1121 = vmatpush.xpose.msra.mxu0 0.0
    %1122 = vmatpush.xpose.msra.mxu0 0.0
    %1123 = vmatpush.xpose.msra.mxu0 0.0
    %1124 = vmatpush.xpose.msra.mxu0 0.0
    %1125 = vmatpush.xpose.msra.mxu0 0.0
    %1126 = vmatpush.xpose.msra.mxu0 %v1109
    %1127 = vmatmul.f32.gmra.mxu0 %v1107
    %v1128 = vpop.f32.mrf.mxu0
    %v1129 = vadd.f32 0.0, %v1128
    %1130 = vdwg.mxu0
    %v1131 = vsel %vm310, %v1129, -inf
    %1132 = vmax.xlane.f32.xlu0 %v1131
    %v1133 = vpop.xlane.xlu0 %1132
    %v1134 = vsub.f32 %v1129, %v1133
    %v1135 = vmul.f32 %v1134, 1.442695
    %v1136 = vpow.pop %v1135
    %v1137 = vsel %vm310, %v1136, 0.0
    %1138 = vadd.xlane.f32.xlu0 %v1137
    %v1139 = vpop.xlane.xlu0 %1138
    %v1140 = vrcp.pop %v1139
    %v1141 = vmul.f32 %v1139, %v1140
    %v1142 = vsub.f32 1.0, %v1141
    %v1143 = vmul.f32 %v1140, %v1142
    %v1144 = vadd.f32 %v1140, %v1143
    %vm1145 = vweird.f32 %v1139
    %vm1146 = vweird.f32 %v1140
    %vm1147 = vmor %vm1145, %vm1146
    %v1148 = vsel %vm1147, %v1140, %v1144
    %v1149 = vand.u32 2147483647, %v1139
    %vm1150 = vcmp.eq.f32.partialorder %v1149, 8.507059e+37
    %v1151 = vand.u32 %v1139, 2147483648
    %v1152 = vor.u32 1.1754944e-38, %v1151
    %v1153 = vsel %vm1150, %v1152, %v1148
    %v1154 = vmul.f32 %v1136, %v1153
    %1156 = vrot.lane.b32.xlu0 %v1154, 24
    %v1157 = vpop.permute.xlu0 %1156
    %1159 = vst.msk [vmem:[#allocation15 + $0x8] sm:$0xff] %vm722, %v1157
    %1160 = vrot.lane.b32.xlu0 %v303, 104
    %v1161 = vpop.permute.xlu0 %1160
    %v1163 = vsel %vm310, %v1154, 0
    %1165 = vmatpush.msra.mxu0 0.0
    %1166 = vmatpush.msra.mxu0 0.0
    %1167 = vmatpush.msra.mxu0 0.0
    %1168 = vmatpush.msra.mxu0 0.0
    %1169 = vmatpush.msra.mxu0 0.0
    %1170 = vmatpush.msra.mxu0 0.0
    %1171 = vmatpush.msra.mxu0 0.0
    %1172 = vmatpush.msra.mxu0 0.0
    %1173 = vmatpush.msra.mxu0 0.0
    %1174 = vmatpush.msra.mxu0 0.0
    %1175 = vmatpush.msra.mxu0 0.0
    %1176 = vmatpush.msra.mxu0 0.0
    %1177 = vmatpush.msra.mxu0 0.0
    %1178 = vmatpush.msra.mxu0 0.0
    %1179 = vmatpush.msra.mxu0 0.0
    %1180 = vmatpush.msra.mxu0 %v1161
    %1181 = vmatmul.f32.gmra.mxu0 %v1163
    %v1182 = vpop.f32.mrf.mxu0
    %v1183 = vadd.f32 0.0, %v1182
    %1184 = vdwg.mxu0
    %v1186 = vsel %vm310, %v1183, 0
    %1188 = vmatpush.xpose.msra.mxu0 0.0
    %1189 = vmatpush.xpose.msra.mxu0 0.0
    %1190 = vmatpush.xpose.msra.mxu0 0.0
    %1191 = vmatpush.xpose.msra.mxu0 0.0
    %1192 = vmatpush.xpose.msra.mxu0 0.0
    %1193 = vmatpush.xpose.msra.mxu0 0.0
    %1194 = vmatpush.xpose.msra.mxu0 0.0
    %1195 = vmatpush.xpose.msra.mxu0 0.0
    %1196 = vmatpush.xpose.msra.mxu0 0.0
    %1197 = vmatpush.xpose.msra.mxu0 0.0
    %1198 = vmatpush.xpose.msra.mxu0 0.0
    %1199 = vmatpush.xpose.msra.mxu0 0.0
    %1200 = vmatpush.xpose.msra.mxu0 %v766
    %1201 = vmatpush.xpose.msra.mxu0 %v764
    %1202 = vmatpush.xpose.msra.mxu0 %v762
    %1203 = vmatpush.xpose.msra.mxu0 %v760
    %1204 = vmatmul.f32.gmra.mxu0 %v1186
    %v1205 = vpop.f32.mrf.mxu0
    %v1206 = vadd.f32 0.0, %v1205
    %1207 = vdwg.mxu0
    %v1208 = vadd.f32 %v1102, %v1206
    %v1209 = vadd.f32 %v1208, %v790
    %1210 = vst.msk [vmem:[#allocation14 + $0x8] sm:$0xff] %vm165, %v1209
    // Predicated region
    $region74: #{tpu_custom_call.1} parent=1 // pred_check
      _
    $region75: #{tpu_custom_call.1} parent=1 // pred_check_branch
      %1212 = sbr.rel (0) target = $region77
    $region76: #{tpu_custom_call.1} parent=1 // pred_region
      %1214 = vsyncadd [#allocation4], 0
      %s1215 = sshll.u32 [#allocation14], 4
      %s1216 = int_to_ptr.vmem [resolvable:$true] %s1215
      %s1217 = sshll.u32 %s11, 4
      %s1218 = int_to_ptr.hbm [resolvable:$true] %s1217
      %1223 = dma.vmem_to_hbm [thread:$0]  %s1216, 256, %s1218, [#allocation4], 128, 128, 8
    $region77: #{tpu_custom_call.1} parent=1 // pred_fallthru
      _
    // Predicated region
    $region78: #{tpu_custom_call.1} parent=1 // pred_check
      _
    $region79: #{tpu_custom_call.1} parent=1 // pred_check_branch
      %1225 = sbr.rel (0) target = $region81
    $region80: #{tpu_custom_call.1} parent=1 // pred_region
      %1227 = vsyncadd [#allocation16], 0
      %s1228 = sshll.u32 [#allocation15], 4
      %s1229 = int_to_ptr.vmem [resolvable:$true] %s1228
      %s1230 = sshll.u32 %s12, 4
      %s1231 = int_to_ptr.hbm [resolvable:$true] %s1230
      %1236 = dma.vmem_to_hbm [thread:$0]  %s1229, 256, %s1231, [#allocation16], 128, 128, 8
    $region81: #{tpu_custom_call.1} parent=1 // pred_fallthru
      _
    // Predicated region
    $region82: #{tpu_custom_call.1} parent=1 // pred_check
      _
    $region83: #{tpu_custom_call.1} parent=1 // pred_check_branch
      %1238 = sbr.rel (0) target = $region85
    $region84: #{tpu_custom_call.1} parent=1 // pred_region
      %1240 = dma.done [#allocation4], 256
    $region85: #{tpu_custom_call.1} parent=1 // pred_fallthru
      _
    // Predicated region
    $region86: #{tpu_custom_call.1} parent=1 // pred_check
      _
    $region87: #{tpu_custom_call.1} parent=1 // pred_check_branch
      %1242 = sbr.rel (0) target = $region89
    $region88: #{tpu_custom_call.1} parent=1 // pred_region
      %1244 = dma.done [#allocation16], 256
    $region89: #{tpu_custom_call.1} parent=1 // pred_fallthru
      _
    %1245 = vsyncpa [#allocation3], 1
    %1246 = vsyncpa [#allocation6], 1
    %1247 = vsyncpa [#allocation9], 1
    %1248 = vsyncpa [#allocation12], 1
    %1249 = vsyncpa [#allocation4], 1
    %1250 = vsyncpa [#allocation16], 1

</llo_original>
